<compile_context>
chip_gen: v7x
topology: tpu7x:2x2x1
jax: 0.10.0
libtpu: 0.0.40
codegen_flags: <defaults>
</compile_context>

<pallas_src>
import math
from functools import partial

import jax
import jax.numpy as jnp
from jax.experimental import pallas as pl
from jax.experimental.pallas import tpu as pltpu


def _round_up(a, b):
    return (a + b - 1) // b * b


def _pick_tile_n(n, max_tile):
    """Largest sequence tile that is either the whole sequence or a multiple-of-8 divisor."""
    if n <= max_tile:
        return n
    for t in range(max_tile, 7, -1):
        if n % t == 0 and t % 8 == 0:
            return t
    return n  # TODO(synk): ragged (masked) edge N-tiles not needed for these shapes


# ----------------------------------------------------------------------------
# Kernel 1: fused KV projection + Taylor kv / k-sum statistics, accumulated over N tiles.
#
# stats[b, h] layout, shape (D_stats, e+1) with e = dim_head (value head dim):
#   row 0                    : [ Sum_m v_m         |  M (number of keys) ]
#   rows off1 .. off1+d-1    : [ k^T v   (d , e)   |  Sum_m k_m          ]
#   rows off2 .. off2+d*d-1  : [ (k(x)k)^T v (d^2,e)| Sum_m (k(x)k)_m    ]
# (The 1/sqrt(2) expansion factors fold into the single 0.5 applied in kernel 2.)
# ----------------------------------------------------------------------------
def _kv_stats_kernel(x_ref, wkv_ref, stats_ref, *, heads, dim_head, off1, off2, cdt):
    @pl.when(pl.program_id(1) == 0)
    def _init():
        stats_ref[...] = jnp.zeros_like(stats_ref)

    d = dim_head
    hd = heads * d
    xb = x_ref[0].astype(cdt)                                   # (tN, dim)
    kv = jnp.dot(xb, wkv_ref[...].astype(cdt),
                 preferred_element_type=jnp.float32)            # (tN, 2*H*d) f32
    tn = kv.shape[0]
    ones = jnp.ones((tn, 1), jnp.float32)

    for h in range(heads):                                      # static loop, heads is small
        kh = kv[:, h * d:(h + 1) * d]                           # (tN, d)
        vh = kv[:, hd + h * d: hd + (h + 1) * d]                # (tN, e)
        v_aug = jnp.concatenate([vh, ones], axis=-1)            # (tN, e+1): [v | 1]
        # one-shot outer product (no per-column concat loop)
        k2 = (kh[:, :, None] * kh[:, None, :]).reshape(tn, d * d)   # (tN, d^2)

        row0 = jnp.sum(v_aug, axis=0, keepdims=True)            # (1, e+1): [Sum v | count]
        kv1 = jax.lax.dot_general(kh.astype(cdt), v_aug.astype(cdt),
                                  (((0,), (0,)), ((), ())),
                                  preferred_element_type=jnp.float32)   # (d,   e+1)
        kv2 = jax.lax.dot_general(k2.astype(cdt), v_aug.astype(cdt),
                                  (((0,), (0,)), ((), ())),
                                  preferred_element_type=jnp.float32)   # (d^2, e+1)

        stats_ref[0, h, 0:1, :] += row0
        stats_ref[0, h, off1:off1 + d, :] += kv1
        stats_ref[0, h, off2:off2 + d * d, :] += kv2


# ----------------------------------------------------------------------------
# Kernel 2: fused Q projection + attention epilogue + head-merge + output projection.
# ----------------------------------------------------------------------------
def _attn_out_kernel(x_ref, wq_ref, stats_ref, wout_ref, o_ref, *,
                     heads, dim_head, off1, off2, scale, eps, cdt):
    d = dim_head
    e = d
    xb = x_ref[0].astype(cdt)                                   # (tN, dim)
    q_all = jnp.dot(xb, wq_ref[...].astype(cdt),
                    preferred_element_type=jnp.float32) * scale  # (tN, H*d) f32, scaled q
    tn = q_all.shape[0]
    dim_out = o_ref.shape[-1]
    acc = jnp.zeros((tn, dim_out), jnp.float32)

    for h in range(heads):
        qh = q_all[:, h * d:(h + 1) * d]                        # (tN, d)
        q2 = (qh[:, :, None] * qh[:, None, :]).reshape(tn, d * d)   # (tN, d^2)

        s0 = stats_ref[0, h, 0:1, :]                            # (1,   e+1)
        s1 = stats_ref[0, h, off1:off1 + d, :]                  # (d,   e+1)
        s2 = stats_ref[0, h, off2:off2 + d * d, :]              # (d^2, e+1)

        # [num | den] in one shot
        nd = (s0
              + jnp.dot(qh.astype(cdt), s1.astype(cdt),
                        preferred_element_type=jnp.float32)
              + 0.5 * jnp.dot(q2.astype(cdt), s2.astype(cdt),
                              preferred_element_type=jnp.float32))   # (tN, e+1) f32

        num = nd[:, :e]
        den = jnp.maximum(nd[:, e:e + 1], eps)                  # f32 clamp (eps semantics kept)
        oh = num * pl.reciprocal(den, approx=True)              # (tN, e)

        # fused head-merge + output projection epilogue
        w_h = wout_ref[h * d:(h + 1) * d, :].astype(cdt)        # (d, dim_out)
        acc = acc + jnp.dot(oh.astype(cdt), w_h,
                            preferred_element_type=jnp.float32)

    o_ref[0] = acc.astype(o_ref.dtype)


# ----------------------------------------------------------------------------
# Wrapper: two pallas_calls on a (B, N_tiles) grid.
# ----------------------------------------------------------------------------
def taylor_linear_attention(x, w_q, w_kv, w_out, *, heads, dim_head, eps=1e-5,
                            mxu_dtype=jnp.bfloat16, max_tile_n=256):
    B, N, dim = x.shape
    H, d = heads, dim_head
    hd = H * d
    e1 = d + 1                                    # value head dim + 1 denominator column
    assert w_q.shape == (dim, hd)
    assert w_kv.shape == (dim, 2 * hd)
    assert w_out.shape == (hd, dim)

    off1 = 8                                      # order-1 rows (order-0 row padded to 8)
    off2 = off1 + _round_up(d, 8)                 # order-2 rows
    d_stats = off2 + _round_up(d * d, 8)
    t_n = _pick_tile_n(N, max_tile_n)
    n_t = pl.cdiv(N, t_n)
    scale = d ** -0.5

    # --- pass 1: KV projection + kv / k-sum statistics (N axis is the reduction) ---
    stats = pl.pallas_call(
        partial(_kv_stats_kernel, heads=H, dim_head=d, off1=off1, off2=off2, cdt=mxu_dtype),
        out_shape=jax.ShapeDtypeStruct((B, H, d_stats, e1), jnp.float32),
        grid=(B, n_t),
        in_specs=[
            pl.BlockSpec((1, t_n, dim), lambda b, t: (b, t, 0)),
            pl.BlockSpec((dim, 2 * hd), lambda b, t: (0, 0)),
        ],
        out_specs=pl.BlockSpec((1, H, d_stats, e1), lambda b, t: (b, 0, 0, 0)),
        compiler_params=pltpu.CompilerParams(
            dimension_semantics=("parallel", "arbitrary"),
            vmem_limit_bytes=32 * 1024 * 1024),
        cost_estimate=pl.CostEstimate(
            flops=2 * B * N * dim * 2 * hd + 2 * B * N * H * (d + d * d) * e1,
            transcendentals=0,
            bytes_accessed=4 * (B * N * dim + dim * 2 * hd + B * H * d_stats * e1)),
    )(x, w_kv)

    # --- pass 2: Q projection + decomposed num/den + fused out-projection ---
    out = pl.pallas_call(
        partial(_attn_out_kernel, heads=H, dim_head=d, off1=off1, off2=off2,
                scale=scale, eps=eps, cdt=mxu_dtype),
        out_shape=jax.ShapeDtypeStruct((B, N, dim), x.dtype),
        grid=(B, n_t),
        in_specs=[
            pl.BlockSpec((1, t_n, dim), lambda b, t: (b, t, 0)),
            pl.BlockSpec((dim, hd), lambda b, t: (0, 0)),
            pl.BlockSpec((1, H, d_stats, e1), lambda b, t: (b, 0, 0, 0)),
            pl.BlockSpec((hd, dim), lambda b, t: (0, 0)),
        ],
        out_specs=pl.BlockSpec((1, t_n, dim), lambda b, t: (b, t, 0)),
        compiler_params=pltpu.CompilerParams(
            dimension_semantics=("parallel", "parallel"),
            vmem_limit_bytes=32 * 1024 * 1024),
        cost_estimate=pl.CostEstimate(
            flops=2 * B * N * dim * hd + 2 * B * N * H * (d + d * d) * e1 + 2 * B * N * hd * dim,
            transcendentals=B * N * H,
            bytes_accessed=4 * (2 * B * N * dim + dim * hd + hd * dim + B * H * d_stats * e1)),
    )(x, w_q, stats, w_out)
    return out


# ----------------------------------------------------------------------------
# Module wrapper (parameter setup only; all compute runs in the two kernels).
# ----------------------------------------------------------------------------
class TaylorSeriesLinearAttnPallas:
    def __init__(self, dim, *, dim_head=8, heads=4, key=None):
        self.dim = dim
        self.heads = heads
        self.dim_head = dim_head
        self.scale = dim_head ** -0.5
        dim_inner = dim_head * heads
        self.dim_inner = dim_inner
        if key is None:
            key = jax.random.PRNGKey(0)
        k1, k2, k3 = jax.random.split(key, 3)
        # nn.Linear-like U(-1/sqrt(fan_in), 1/sqrt(fan_in)); stored (in_features, out_features)
        self.w_q = jax.random.uniform(
            k1, (dim, dim_inner), jnp.float32, -1 / math.sqrt(dim), 1 / math.sqrt(dim))
        self.w_kv = jax.random.uniform(
            k2, (dim, 2 * dim_inner), jnp.float32, -1 / math.sqrt(dim), 1 / math.sqrt(dim))
        self.w_out = jax.random.uniform(
            k3, (dim_inner, dim), jnp.float32,
            -1 / math.sqrt(dim_inner), 1 / math.sqrt(dim_inner))
        # TODO(synk): causal path (fast_transformers CausalDotProduct), cache, mask, rotary,
        # value gates, prenorm RMSNorm and token-shift are not exercised by the default
        # forward and are not implemented here.

    def __call__(self, x, eps=1e-5, mxu_dtype=jnp.bfloat16, max_tile_n=256):
        return taylor_linear_attention(
            x, self.w_q, self.w_kv, self.w_out,
            heads=self.heads, dim_head=self.dim_head, eps=eps,
            mxu_dtype=mxu_dtype, max_tile_n=max_tile_n)


# ----------------------------------------------------------------------------
# Pure-JAX reference (mirrors the PyTorch forward) for correctness checks.
# ----------------------------------------------------------------------------
def reference_forward(x, w_q, w_kv, w_out, heads, dim_head, eps=1e-5):
    B, N, D = x.shape
    H, d = heads, dim_head
    scale = d ** -0.5
    q = (x @ w_q).reshape(B, N, H, d).transpose(0, 2, 1, 3)
    kv = (x @ w_kv).reshape(B, N, 2, H, d)
    k = kv[:, :, 0].transpose(0, 2, 1, 3)
    v = kv[:, :, 1].transpose(0, 2, 1, 3)
    q = q * scale

    def expand(t):
        *lead, dd = t.shape
        x0 = jnp.ones((*lead, 1), t.dtype)
        x2 = (t[..., :, None] * t[..., None, :]) * (0.5 ** 0.5)
        x2 = x2.reshape(*lead, dd * dd)
        return jnp.concatenate([x0, t, x2], axis=-1)

    qe, ke = expand(q), expand(k)
    kvmat = jnp.einsum('bhnd,bhne->bhde', ke, v)
    qk_inv = 1.0 / jnp.maximum(jnp.einsum('bhnd,bhmd->bhn', qe, ke), eps)
    out = jnp.einsum('bhnd,bhde,bhn->bhne', qe, kvmat, qk_inv)
    out = out.transpose(0, 2, 1, 3).reshape(B, N, H * d)
    return out @ w_out


if __name__ == "__main__":
    key = jax.random.PRNGKey(0)
    kx, kw, kx2 = jax.random.split(key, 3)

    B, N, dim = 2, 8, 32
    heads, dim_head = 4, 8

    x = jax.random.normal(kx, (B, N, dim), jnp.float32)
    attn = TaylorSeriesLinearAttnPallas(dim, dim_head=dim_head, heads=heads, key=kw)
    ref = reference_forward(x, attn.w_q, attn.w_kv, attn.w_out, heads, dim_head)

    # f32 MXU path (tight numerical check).
    out_f32 = jax.block_until_ready(attn(x, mxu_dtype=jnp.float32))
    assert out_f32.shape == (B, N, dim)
    assert jnp.allclose(out_f32, ref, atol=5e-3, rtol=5e-3), "f32 Pallas output mismatch vs reference"

    # Default bf16-MXU / f32-accumulate path (looser numerical check).
    out_bf16 = jax.block_until_ready(attn(x))
    assert jnp.allclose(out_bf16, ref, atol=5e-2, rtol=5e-2), "bf16 Pallas output mismatch vs reference"

    # Longer sequence that exercises the N-tiled kv-stats accumulation ("arbitrary" axis).
    N2 = 32
    x2 = jax.random.normal(kx2, (B, N2, dim), jnp.float32)
    ref2 = reference_forward(x2, attn.w_q, attn.w_kv, attn.w_out, heads, dim_head)
    out2 = jax.block_until_ready(attn(x2, mxu_dtype=jnp.float32, max_tile_n=8))
    assert out2.shape == (B, N2, dim)
    assert jnp.allclose(out2, ref2, atol=5e-3, rtol=5e-3), "tiled Pallas output mismatch vs reference"

    print("KERNEL_OK")
</pallas_src>

<mosaic_0001>
module attributes {stable_mosaic.version = 11 : i64} {
  func.func @_kv_stats_kernel(%arg0: i32, %arg1: i32, %arg2: memref<1x8x32xf32, #tpu.memory_space<vmem>>, %arg3: memref<32x64xf32, #tpu.memory_space<vmem>>, %arg4: memref<1x4x80x9xf32, #tpu.memory_space<vmem>>) attributes {dimension_semantics = [#tpu.dimension_semantics<parallel>, #tpu.dimension_semantics<arbitrary>], iteration_bounds = array<i64: 2, 1>, scalar_prefetch = 0 : i64, scratch_operands = 0 : i64, tpu.core_type = #tpu.core_type<tc>, window_params = [{transform_indices = @transform_0, window_bounds = array<i64: 1, 8, 32>}, {pipeline_mode = #tpu.pipeline_mode<synchronous>, transform_indices = @transform_1, window_bounds = array<i64: 32, 64>}, {transform_indices = @transform_2, window_bounds = array<i64: 1, 4, 80, 9>}]} {
    %c0_i32 = arith.constant 0 : i32
    %0 = arith.cmpi eq, %arg1, %c0_i32 : i32
    %1 = arith.extui %0 : i1 to i32
    %c0_i32_0 = arith.constant 0 : i32
    %2 = arith.cmpi ne, %1, %c0_i32_0 : i32
    scf.if %2 {
      %cst_109 = arith.constant 0.000000e+00 : f32
      %132 = vector.broadcast %cst_109 : f32 to vector<1x4x80x9xf32>
      %c0_110 = arith.constant 0 : index
      %c0_111 = arith.constant 0 : index
      %c0_112 = arith.constant 0 : index
      %c0_113 = arith.constant 0 : index
      %133 = vector.load %arg4[%c0_110, %c0_111, %c0_112, %c0_113] : memref<1x4x80x9xf32, #tpu.memory_space<vmem>>, vector<1x4x80x9xf32>
      tpu.vector_store %arg4[%c0_110, %c0_111, %c0_112, %c0_113], %132 {strides = array<i32>} : memref<1x4x80x9xf32, #tpu.memory_space<vmem>>, vector<1x4x80x9xf32>,
    } else {
    }
    %c0 = arith.constant 0 : index
    %c0_1 = arith.constant 0 : index
    %c0_2 = arith.constant 0 : index
    %3 = vector.load %arg2[%c0, %c0_1, %c0_2] : memref<1x8x32xf32, #tpu.memory_space<vmem>>, vector<1x8x32xf32>
    %4 = vector.shape_cast %3 : vector<1x8x32xf32> to vector<8x32xf32>
    %c0_3 = arith.constant 0 : index
    %c0_4 = arith.constant 0 : index
    %5 = vector.load %arg3[%c0_3, %c0_4] : memref<32x64xf32, #tpu.memory_space<vmem>>, vector<32x64xf32>
    %cst = arith.constant dense<0.000000e+00> : vector<8x64xf32>
    %6 = tpu.matmul %4, %5, %cst {dimension_numbers = #tpu.dot_dimension_numbers<[1], [0], [0], [1], [0, 0, 1, 1], [], []>} : vector<8x32xf32>, vector<32x64xf32>, vector<8x64xf32> -> vector<8x64xf32>
    %cst_5 = arith.constant 1.000000e+00 : f32
    %7 = vector.broadcast %cst_5 : f32 to vector<8x1xf32>
    %8 = vector.extract_strided_slice %6 {offsets = [0, 0], sizes = [8, 8], strides = [1, 1]} : vector<8x64xf32> to vector<8x8xf32>
    %9 = vector.extract_strided_slice %6 {offsets = [0, 32], sizes = [8, 8], strides = [1, 1]} : vector<8x64xf32> to vector<8x8xf32>
    %10 = tpu.concatenate %9, %7 in 1 : vector<8x8xf32>, vector<8x1xf32> -> vector<8x9xf32>
    %11 = vector.shape_cast %8 : vector<8x8xf32> to vector<8x8x1xf32>
    %12 = vector.shape_cast %8 : vector<8x8xf32> to vector<8x1x8xf32>
    %13 = vector.broadcast %11 : vector<8x8x1xf32> to vector<8x8x8xf32>
    %14 = vector.broadcast %12 : vector<8x1x8xf32> to vector<8x8x8xf32>
    %15 = arith.mulf %13, %14 : vector<8x8x8xf32>
    %16 = vector.shape_cast %15 : vector<8x8x8xf32> to vector<8x64xf32>
    %cst_6 = arith.constant dense<0.000000e+00> : vector<9xf32>
    %17 = vector.multi_reduction <add>, %10, %cst_6 [0] : vector<8x9xf32> to vector<9xf32>
    %18 = vector.shape_cast %17 : vector<9xf32> to vector<1x9xf32>
    %cst_7 = arith.constant dense<0.000000e+00> : vector<8x9xf32>
    %19 = tpu.matmul %8, %10, %cst_7 {dimension_numbers = #tpu.dot_dimension_numbers<[0], [0], [1], [1], [0, 1, 1, 1], [], []>} : vector<8x8xf32>, vector<8x9xf32>, vector<8x9xf32> -> vector<8x9xf32>
    %cst_8 = arith.constant dense<0.000000e+00> : vector<64x9xf32>
    %20 = tpu.matmul %16, %10, %cst_8 {dimension_numbers = #tpu.dot_dimension_numbers<[0], [0], [1], [1], [0, 1, 1, 1], [], []>} : vector<8x64xf32>, vector<8x9xf32>, vector<64x9xf32> -> vector<64x9xf32>
    %c0_9 = arith.constant 0 : index
    %c0_10 = arith.constant 0 : index
    %c0_11 = arith.constant 0 : index
    %c0_12 = arith.constant 0 : index
    %21 = vector.load %arg4[%c0_9, %c0_10, %c0_11, %c0_12] : memref<1x4x80x9xf32, #tpu.memory_space<vmem>>, vector<1x1x1x9xf32>
    %22 = vector.shape_cast %21 : vector<1x1x1x9xf32> to vector<1x9xf32>
    %23 = arith.addf %22, %18 : vector<1x9xf32>
    %c0_13 = arith.constant 0 : index
    %c0_14 = arith.constant 0 : index
    %c0_15 = arith.constant 0 : index
    %c0_16 = arith.constant 0 : index
    %24 = vector.load %arg4[%c0_13, %c0_14, %c0_15, %c0_16] : memref<1x4x80x9xf32, #tpu.memory_space<vmem>>, vector<1x1x1x9xf32>
    %25 = vector.shape_cast %24 : vector<1x1x1x9xf32> to vector<1x9xf32>
    %26 = vector.shape_cast %23 : vector<1x9xf32> to vector<1x1x1x9xf32>
    tpu.vector_store %arg4[%c0_13, %c0_14, %c0_15, %c0_16], %26 {strides = array<i32>} : memref<1x4x80x9xf32, #tpu.memory_space<vmem>>, vector<1x1x1x9xf32>,
    %c0_17 = arith.constant 0 : index
    %c0_18 = arith.constant 0 : index
    %c8 = arith.constant 8 : index
    %c0_19 = arith.constant 0 : index
    %27 = vector.load %arg4[%c0_17, %c0_18, %c8, %c0_19] : memref<1x4x80x9xf32, #tpu.memory_space<vmem>>, vector<1x1x8x9xf32>
    %28 = vector.shape_cast %27 : vector<1x1x8x9xf32> to vector<8x9xf32>
    %29 = arith.addf %28, %19 : vector<8x9xf32>
    %c0_20 = arith.constant 0 : index
    %c0_21 = arith.constant 0 : index
    %c8_22 = arith.constant 8 : index
    %c0_23 = arith.constant 0 : index
    %30 = vector.load %arg4[%c0_20, %c0_21, %c8_22, %c0_23] : memref<1x4x80x9xf32, #tpu.memory_space<vmem>>, vector<1x1x8x9xf32>
    %31 = vector.shape_cast %30 : vector<1x1x8x9xf32> to vector<8x9xf32>
    %32 = vector.shape_cast %29 : vector<8x9xf32> to vector<1x1x8x9xf32>
    tpu.vector_store %arg4[%c0_20, %c0_21, %c8_22, %c0_23], %32 {strides = array<i32>} : memref<1x4x80x9xf32, #tpu.memory_space<vmem>>, vector<1x1x8x9xf32>,
    %c0_24 = arith.constant 0 : index
    %c0_25 = arith.constant 0 : index
    %c16 = arith.constant 16 : index
    %c0_26 = arith.constant 0 : index
    %33 = vector.load %arg4[%c0_24, %c0_25, %c16, %c0_26] : memref<1x4x80x9xf32, #tpu.memory_space<vmem>>, vector<1x1x64x9xf32>
    %34 = vector.shape_cast %33 : vector<1x1x64x9xf32> to vector<64x9xf32>
    %35 = arith.addf %34, %20 : vector<64x9xf32>
    %c0_27 = arith.constant 0 : index
    %c0_28 = arith.constant 0 : index
    %c16_29 = arith.constant 16 : index
    %c0_30 = arith.constant 0 : index
    %36 = vector.load %arg4[%c0_27, %c0_28, %c16_29, %c0_30] : memref<1x4x80x9xf32, #tpu.memory_space<vmem>>, vector<1x1x64x9xf32>
    %37 = vector.shape_cast %36 : vector<1x1x64x9xf32> to vector<64x9xf32>
    %38 = vector.shape_cast %35 : vector<64x9xf32> to vector<1x1x64x9xf32>
    tpu.vector_store %arg4[%c0_27, %c0_28, %c16_29, %c0_30], %38 {strides = array<i32>} : memref<1x4x80x9xf32, #tpu.memory_space<vmem>>, vector<1x1x64x9xf32>,
    %39 = vector.extract_strided_slice %6 {offsets = [0, 8], sizes = [8, 8], strides = [1, 1]} : vector<8x64xf32> to vector<8x8xf32>
    %40 = vector.extract_strided_slice %6 {offsets = [0, 40], sizes = [8, 8], strides = [1, 1]} : vector<8x64xf32> to vector<8x8xf32>
    %41 = tpu.concatenate %40, %7 in 1 : vector<8x8xf32>, vector<8x1xf32> -> vector<8x9xf32>
    %42 = vector.shape_cast %39 : vector<8x8xf32> to vector<8x8x1xf32>
    %43 = vector.shape_cast %39 : vector<8x8xf32> to vector<8x1x8xf32>
    %44 = vector.broadcast %42 : vector<8x8x1xf32> to vector<8x8x8xf32>
    %45 = vector.broadcast %43 : vector<8x1x8xf32> to vector<8x8x8xf32>
    %46 = arith.mulf %44, %45 : vector<8x8x8xf32>
    %47 = vector.shape_cast %46 : vector<8x8x8xf32> to vector<8x64xf32>
    %cst_31 = arith.constant dense<0.000000e+00> : vector<9xf32>
    %48 = vector.multi_reduction <add>, %41, %cst_31 [0] : vector<8x9xf32> to vector<9xf32>
    %49 = vector.shape_cast %48 : vector<9xf32> to vector<1x9xf32>
    %cst_32 = arith.constant dense<0.000000e+00> : vector<8x9xf32>
    %50 = tpu.matmul %39, %41, %cst_32 {dimension_numbers = #tpu.dot_dimension_numbers<[0], [0], [1], [1], [0, 1, 1, 1], [], []>} : vector<8x8xf32>, vector<8x9xf32>, vector<8x9xf32> -> vector<8x9xf32>
    %cst_33 = arith.constant dense<0.000000e+00> : vector<64x9xf32>
    %51 = tpu.matmul %47, %41, %cst_33 {dimension_numbers = #tpu.dot_dimension_numbers<[0], [0], [1], [1], [0, 1, 1, 1], [], []>} : vector<8x64xf32>, vector<8x9xf32>, vector<64x9xf32> -> vector<64x9xf32>
    %c0_34 = arith.constant 0 : index
    %c1 = arith.constant 1 : index
    %c0_35 = arith.constant 0 : index
    %c0_36 = arith.constant 0 : index
    %52 = vector.load %arg4[%c0_34, %c1, %c0_35, %c0_36] : memref<1x4x80x9xf32, #tpu.memory_space<vmem>>, vector<1x1x1x9xf32>
    %53 = vector.shape_cast %52 : vector<1x1x1x9xf32> to vector<1x9xf32>
    %54 = arith.addf %53, %49 : vector<1x9xf32>
    %c0_37 = arith.constant 0 : index
    %c1_38 = arith.constant 1 : index
    %c0_39 = arith.constant 0 : index
    %c0_40 = arith.constant 0 : index
    %55 = vector.load %arg4[%c0_37, %c1_38, %c0_39, %c0_40] : memref<1x4x80x9xf32, #tpu.memory_space<vmem>>, vector<1x1x1x9xf32>
    %56 = vector.shape_cast %55 : vector<1x1x1x9xf32> to vector<1x9xf32>
    %57 = vector.shape_cast %54 : vector<1x9xf32> to vector<1x1x1x9xf32>
    tpu.vector_store %arg4[%c0_37, %c1_38, %c0_39, %c0_40], %57 {strides = array<i32>} : memref<1x4x80x9xf32, #tpu.memory_space<vmem>>, vector<1x1x1x9xf32>,
    %c0_41 = arith.constant 0 : index
    %c1_42 = arith.constant 1 : index
    %c8_43 = arith.constant 8 : index
    %c0_44 = arith.constant 0 : index
    %58 = vector.load %arg4[%c0_41, %c1_42, %c8_43, %c0_44] : memref<1x4x80x9xf32, #tpu.memory_space<vmem>>, vector<1x1x8x9xf32>
    %59 = vector.shape_cast %58 : vector<1x1x8x9xf32> to vector<8x9xf32>
    %60 = arith.addf %59, %50 : vector<8x9xf32>
    %c0_45 = arith.constant 0 : index
    %c1_46 = arith.constant 1 : index
    %c8_47 = arith.constant 8 : index
    %c0_48 = arith.constant 0 : index
    %61 = vector.load %arg4[%c0_45, %c1_46, %c8_47, %c0_48] : memref<1x4x80x9xf32, #tpu.memory_space<vmem>>, vector<1x1x8x9xf32>
    %62 = vector.shape_cast %61 : vector<1x1x8x9xf32> to vector<8x9xf32>
    %63 = vector.shape_cast %60 : vector<8x9xf32> to vector<1x1x8x9xf32>
    tpu.vector_store %arg4[%c0_45, %c1_46, %c8_47, %c0_48], %63 {strides = array<i32>} : memref<1x4x80x9xf32, #tpu.memory_space<vmem>>, vector<1x1x8x9xf32>,
    %c0_49 = arith.constant 0 : index
    %c1_50 = arith.constant 1 : index
    %c16_51 = arith.constant 16 : index
    %c0_52 = arith.constant 0 : index
    %64 = vector.load %arg4[%c0_49, %c1_50, %c16_51, %c0_52] : memref<1x4x80x9xf32, #tpu.memory_space<vmem>>, vector<1x1x64x9xf32>
    %65 = vector.shape_cast %64 : vector<1x1x64x9xf32> to vector<64x9xf32>
    %66 = arith.addf %65, %51 : vector<64x9xf32>
    %c0_53 = arith.constant 0 : index
    %c1_54 = arith.constant 1 : index
    %c16_55 = arith.constant 16 : index
    %c0_56 = arith.constant 0 : index
    %67 = vector.load %arg4[%c0_53, %c1_54, %c16_55, %c0_56] : memref<1x4x80x9xf32, #tpu.memory_space<vmem>>, vector<1x1x64x9xf32>
    %68 = vector.shape_cast %67 : vector<1x1x64x9xf32> to vector<64x9xf32>
    %69 = vector.shape_cast %66 : vector<64x9xf32> to vector<1x1x64x9xf32>
    tpu.vector_store %arg4[%c0_53, %c1_54, %c16_55, %c0_56], %69 {strides = array<i32>} : memref<1x4x80x9xf32, #tpu.memory_space<vmem>>, vector<1x1x64x9xf32>,
    %70 = vector.extract_strided_slice %6 {offsets = [0, 16], sizes = [8, 8], strides = [1, 1]} : vector<8x64xf32> to vector<8x8xf32>
    %71 = vector.extract_strided_slice %6 {offsets = [0, 48], sizes = [8, 8], strides = [1, 1]} : vector<8x64xf32> to vector<8x8xf32>
    %72 = tpu.concatenate %71, %7 in 1 : vector<8x8xf32>, vector<8x1xf32> -> vector<8x9xf32>
    %73 = vector.shape_cast %70 : vector<8x8xf32> to vector<8x8x1xf32>
    %74 = vector.shape_cast %70 : vector<8x8xf32> to vector<8x1x8xf32>
    %75 = vector.broadcast %73 : vector<8x8x1xf32> to vector<8x8x8xf32>
    %76 = vector.broadcast %74 : vector<8x1x8xf32> to vector<8x8x8xf32>
    %77 = arith.mulf %75, %76 : vector<8x8x8xf32>
    %78 = vector.shape_cast %77 : vector<8x8x8xf32> to vector<8x64xf32>
    %cst_57 = arith.constant dense<0.000000e+00> : vector<9xf32>
    %79 = vector.multi_reduction <add>, %72, %cst_57 [0] : vector<8x9xf32> to vector<9xf32>
    %80 = vector.shape_cast %79 : vector<9xf32> to vector<1x9xf32>
    %cst_58 = arith.constant dense<0.000000e+00> : vector<8x9xf32>
    %81 = tpu.matmul %70, %72, %cst_58 {dimension_numbers = #tpu.dot_dimension_numbers<[0], [0], [1], [1], [0, 1, 1, 1], [], []>} : vector<8x8xf32>, vector<8x9xf32>, vector<8x9xf32> -> vector<8x9xf32>
    %cst_59 = arith.constant dense<0.000000e+00> : vector<64x9xf32>
    %82 = tpu.matmul %78, %72, %cst_59 {dimension_numbers = #tpu.dot_dimension_numbers<[0], [0], [1], [1], [0, 1, 1, 1], [], []>} : vector<8x64xf32>, vector<8x9xf32>, vector<64x9xf32> -> vector<64x9xf32>
    %c0_60 = arith.constant 0 : index
    %c2 = arith.constant 2 : index
    %c0_61 = arith.constant 0 : index
    %c0_62 = arith.constant 0 : index
    %83 = vector.load %arg4[%c0_60, %c2, %c0_61, %c0_62] : memref<1x4x80x9xf32, #tpu.memory_space<vmem>>, vector<1x1x1x9xf32>
    %84 = vector.shape_cast %83 : vector<1x1x1x9xf32> to vector<1x9xf32>
    %85 = arith.addf %84, %80 : vector<1x9xf32>
    %c0_63 = arith.constant 0 : index
    %c2_64 = arith.constant 2 : index
    %c0_65 = arith.constant 0 : index
    %c0_66 = arith.constant 0 : index
    %86 = vector.load %arg4[%c0_63, %c2_64, %c0_65, %c0_66] : memref<1x4x80x9xf32, #tpu.memory_space<vmem>>, vector<1x1x1x9xf32>
    %87 = vector.shape_cast %86 : vector<1x1x1x9xf32> to vector<1x9xf32>
    %88 = vector.shape_cast %85 : vector<1x9xf32> to vector<1x1x1x9xf32>
    tpu.vector_store %arg4[%c0_63, %c2_64, %c0_65, %c0_66], %88 {strides = array<i32>} : memref<1x4x80x9xf32, #tpu.memory_space<vmem>>, vector<1x1x1x9xf32>,
    %c0_67 = arith.constant 0 : index
    %c2_68 = arith.constant 2 : index
    %c8_69 = arith.constant 8 : index
    %c0_70 = arith.constant 0 : index
    %89 = vector.load %arg4[%c0_67, %c2_68, %c8_69, %c0_70] : memref<1x4x80x9xf32, #tpu.memory_space<vmem>>, vector<1x1x8x9xf32>
    %90 = vector.shape_cast %89 : vector<1x1x8x9xf32> to vector<8x9xf32>
    %91 = arith.addf %90, %81 : vector<8x9xf32>
    %c0_71 = arith.constant 0 : index
    %c2_72 = arith.constant 2 : index
    %c8_73 = arith.constant 8 : index
    %c0_74 = arith.constant 0 : index
    %92 = vector.load %arg4[%c0_71, %c2_72, %c8_73, %c0_74] : memref<1x4x80x9xf32, #tpu.memory_space<vmem>>, vector<1x1x8x9xf32>
    %93 = vector.shape_cast %92 : vector<1x1x8x9xf32> to vector<8x9xf32>
    %94 = vector.shape_cast %91 : vector<8x9xf32> to vector<1x1x8x9xf32>
    tpu.vector_store %arg4[%c0_71, %c2_72, %c8_73, %c0_74], %94 {strides = array<i32>} : memref<1x4x80x9xf32, #tpu.memory_space<vmem>>, vector<1x1x8x9xf32>,
    %c0_75 = arith.constant 0 : index
    %c2_76 = arith.constant 2 : index
    %c16_77 = arith.constant 16 : index
    %c0_78 = arith.constant 0 : index
    %95 = vector.load %arg4[%c0_75, %c2_76, %c16_77, %c0_78] : memref<1x4x80x9xf32, #tpu.memory_space<vmem>>, vector<1x1x64x9xf32>
    %96 = vector.shape_cast %95 : vector<1x1x64x9xf32> to vector<64x9xf32>
    %97 = arith.addf %96, %82 : vector<64x9xf32>
    %c0_79 = arith.constant 0 : index
    %c2_80 = arith.constant 2 : index
    %c16_81 = arith.constant 16 : index
    %c0_82 = arith.constant 0 : index
    %98 = vector.load %arg4[%c0_79, %c2_80, %c16_81, %c0_82] : memref<1x4x80x9xf32, #tpu.memory_space<vmem>>, vector<1x1x64x9xf32>
    %99 = vector.shape_cast %98 : vector<1x1x64x9xf32> to vector<64x9xf32>
    %100 = vector.shape_cast %97 : vector<64x9xf32> to vector<1x1x64x9xf32>
    tpu.vector_store %arg4[%c0_79, %c2_80, %c16_81, %c0_82], %100 {strides = array<i32>} : memref<1x4x80x9xf32, #tpu.memory_space<vmem>>, vector<1x1x64x9xf32>,
    %101 = vector.extract_strided_slice %6 {offsets = [0, 24], sizes = [8, 8], strides = [1, 1]} : vector<8x64xf32> to vector<8x8xf32>
    %102 = vector.extract_strided_slice %6 {offsets = [0, 56], sizes = [8, 8], strides = [1, 1]} : vector<8x64xf32> to vector<8x8xf32>
    %103 = tpu.concatenate %102, %7 in 1 : vector<8x8xf32>, vector<8x1xf32> -> vector<8x9xf32>
    %104 = vector.shape_cast %101 : vector<8x8xf32> to vector<8x8x1xf32>
    %105 = vector.shape_cast %101 : vector<8x8xf32> to vector<8x1x8xf32>
    %106 = vector.broadcast %104 : vector<8x8x1xf32> to vector<8x8x8xf32>
    %107 = vector.broadcast %105 : vector<8x1x8xf32> to vector<8x8x8xf32>
    %108 = arith.mulf %106, %107 : vector<8x8x8xf32>
    %109 = vector.shape_cast %108 : vector<8x8x8xf32> to vector<8x64xf32>
    %cst_83 = arith.constant dense<0.000000e+00> : vector<9xf32>
    %110 = vector.multi_reduction <add>, %103, %cst_83 [0] : vector<8x9xf32> to vector<9xf32>
    %111 = vector.shape_cast %110 : vector<9xf32> to vector<1x9xf32>
    %cst_84 = arith.constant dense<0.000000e+00> : vector<8x9xf32>
    %112 = tpu.matmul %101, %103, %cst_84 {dimension_numbers = #tpu.dot_dimension_numbers<[0], [0], [1], [1], [0, 1, 1, 1], [], []>} : vector<8x8xf32>, vector<8x9xf32>, vector<8x9xf32> -> vector<8x9xf32>
    %cst_85 = arith.constant dense<0.000000e+00> : vector<64x9xf32>
    %113 = tpu.matmul %109, %103, %cst_85 {dimension_numbers = #tpu.dot_dimension_numbers<[0], [0], [1], [1], [0, 1, 1, 1], [], []>} : vector<8x64xf32>, vector<8x9xf32>, vector<64x9xf32> -> vector<64x9xf32>
    %c0_86 = arith.constant 0 : index
    %c3 = arith.constant 3 : index
    %c0_87 = arith.constant 0 : index
    %c0_88 = arith.constant 0 : index
    %114 = vector.load %arg4[%c0_86, %c3, %c0_87, %c0_88] : memref<1x4x80x9xf32, #tpu.memory_space<vmem>>, vector<1x1x1x9xf32>
    %115 = vector.shape_cast %114 : vector<1x1x1x9xf32> to vector<1x9xf32>
    %116 = arith.addf %115, %111 : vector<1x9xf32>
    %c0_89 = arith.constant 0 : index
    %c3_90 = arith.constant 3 : index
    %c0_91 = arith.constant 0 : index
    %c0_92 = arith.constant 0 : index
    %117 = vector.load %arg4[%c0_89, %c3_90, %c0_91, %c0_92] : memref<1x4x80x9xf32, #tpu.memory_space<vmem>>, vector<1x1x1x9xf32>
    %118 = vector.shape_cast %117 : vector<1x1x1x9xf32> to vector<1x9xf32>
    %119 = vector.shape_cast %116 : vector<1x9xf32> to vector<1x1x1x9xf32>
    tpu.vector_store %arg4[%c0_89, %c3_90, %c0_91, %c0_92], %119 {strides = array<i32>} : memref<1x4x80x9xf32, #tpu.memory_space<vmem>>, vector<1x1x1x9xf32>,
    %c0_93 = arith.constant 0 : index
    %c3_94 = arith.constant 3 : index
    %c8_95 = arith.constant 8 : index
    %c0_96 = arith.constant 0 : index
    %120 = vector.load %arg4[%c0_93, %c3_94, %c8_95, %c0_96] : memref<1x4x80x9xf32, #tpu.memory_space<vmem>>, vector<1x1x8x9xf32>
    %121 = vector.shape_cast %120 : vector<1x1x8x9xf32> to vector<8x9xf32>
    %122 = arith.addf %121, %112 : vector<8x9xf32>
    %c0_97 = arith.constant 0 : index
    %c3_98 = arith.constant 3 : index
    %c8_99 = arith.constant 8 : index
    %c0_100 = arith.constant 0 : index
    %123 = vector.load %arg4[%c0_97, %c3_98, %c8_99, %c0_100] : memref<1x4x80x9xf32, #tpu.memory_space<vmem>>, vector<1x1x8x9xf32>
    %124 = vector.shape_cast %123 : vector<1x1x8x9xf32> to vector<8x9xf32>
    %125 = vector.shape_cast %122 : vector<8x9xf32> to vector<1x1x8x9xf32>
    tpu.vector_store %arg4[%c0_97, %c3_98, %c8_99, %c0_100], %125 {strides = array<i32>} : memref<1x4x80x9xf32, #tpu.memory_space<vmem>>, vector<1x1x8x9xf32>,
    %c0_101 = arith.constant 0 : index
    %c3_102 = arith.constant 3 : index
    %c16_103 = arith.constant 16 : index
    %c0_104 = arith.constant 0 : index
    %126 = vector.load %arg4[%c0_101, %c3_102, %c16_103, %c0_104] : memref<1x4x80x9xf32, #tpu.memory_space<vmem>>, vector<1x1x64x9xf32>
    %127 = vector.shape_cast %126 : vector<1x1x64x9xf32> to vector<64x9xf32>
    %128 = arith.addf %127, %113 : vector<64x9xf32>
    %c0_105 = arith.constant 0 : index
    %c3_106 = arith.constant 3 : index
    %c16_107 = arith.constant 16 : index
    %c0_108 = arith.constant 0 : index
    %129 = vector.load %arg4[%c0_105, %c3_106, %c16_107, %c0_108] : memref<1x4x80x9xf32, #tpu.memory_space<vmem>>, vector<1x1x64x9xf32>
    %130 = vector.shape_cast %129 : vector<1x1x64x9xf32> to vector<64x9xf32>
    %131 = vector.shape_cast %128 : vector<64x9xf32> to vector<1x1x64x9xf32>
    tpu.vector_store %arg4[%c0_105, %c3_106, %c16_107, %c0_108], %131 {strides = array<i32>} : memref<1x4x80x9xf32, #tpu.memory_space<vmem>>, vector<1x1x64x9xf32>,
    return
  }
  func.func @transform_0(%arg0: i32, %arg1: i32) -> (i32, i32, i32) {
    %c0_i32 = arith.constant 0 : i32
    %c0_i32_0 = arith.constant 0 : i32
    return %arg0, %arg1, %c0_i32 : i32, i32, i32
  }
  func.func @transform_1(%arg0: i32, %arg1: i32) -> (i32, i32) {
    %c0_i32 = arith.constant 0 : i32
    %c0_i32_0 = arith.constant 0 : i32
    %c0_i32_1 = arith.constant 0 : i32
    return %c0_i32, %c0_i32_0 : i32, i32
  }
  func.func @transform_2(%arg0: i32, %arg1: i32) -> (i32, i32, i32, i32) {
    %c0_i32 = arith.constant 0 : i32
    %c0_i32_0 = arith.constant 0 : i32
    %c0_i32_1 = arith.constant 0 : i32
    %c0_i32_2 = arith.constant 0 : i32
    return %arg0, %c0_i32, %c0_i32_0, %c0_i32_1 : i32, i32, i32, i32
  }
}

</mosaic_0001>

<llo_original>
// kernel: tpu_custom_call.1
$region0: #{tpu_custom_call.1}
  #allocation0 [shape = 'u32[]', space=smem, size = 0x4, offset = 0x4, fixed_abs, tag = 'smem constant byte address 0x4 - core index']
  #allocation1 [shape = 'u32[144,128]{1,0:T(1,128)}', space=vmem, size = 0x12000, scoped, tag = 'internal scratch']
  %s0 = inlined_call_operand.hbm [shape: f32[2,8,32], index: 0, kind: input, shape index: {}]
  %s1 = inlined_call_operand.hbm [shape: f32[32,64], index: 1, kind: input, shape index: {}]
  %s2 = inlined_call_operand.vmem [shape: f32[2,4,80,9], index: 2, kind: output, shape index: {}]
  %s3 = sld [smem:[#allocation0]]
  $region53: #{tpu_custom_call.1} parent=0
    _
  %s5 = ssub.s32 1, %s3
  %s6 = scalar_select 0, %s5, %s3
  $region1: #{tpu_custom_call.1} parent=0
    #allocation2 [shape = 'u8[8192]{0}', space=vmem, size = 0x2000, scoped, tag = 'input window, operand 0']
    #allocation3 [shape = 's32[2]{0}', space=sflag, size = 0x8, scoped, tag = 'scoped memory for tpu_custom_call.1']
    #allocation4 [shape = 'u8[16384]{0}', space=vmem, size = 0x4000, scoped, tag = 'input window, operand 1, single buffered']
    #allocation5 [shape = 's32[1]{0}', space=sflag, size = 0x4, scoped, tag = 'scoped memory for tpu_custom_call.1']
    %7 = vsyncpa [#allocation3], 0
    %s8 = scalar_lea.sflag [#allocation3], 1
    %9 = vsyncpa %s8, 0
    %10 = vsyncpa [#allocation5], 0
    loop: start=0, step=1, limit=4
    $region2: #{tpu_custom_call.1} parent=1 // loop_pre_header
      _
    $region3: #{tpu_custom_call.1} parent=1 // loop_header
      %s12 = sphi 0, %s16
      %p13 = scmp.ge.s32.totalorder %s12, 4
      %s19 = sphi 0, %s31
      %s20 = sphi 0, %s27
      %s21 = sphi 0, %s19
      %s22 = sphi 0, %s20
      %s23 = sphi 0, %s21
      %s24 = sphi 0, %s22
      %s36 = sphi 0, %s38
      %s39 = sphi 0, %s36
      %s40 = sphi 0, %s39
      %s56 = sphi 0, %s40
      %s60 = sphi 0, %s60
      %s62 = sphi 0, %s60
      %s63 = sphi 0, %s62
      %s77 = sphi 0, %s63
      %s83 = sphi 0, %s85
      %s86 = sphi 0, %s83
      %s87 = sphi 0, %s86
      %s103 = sphi 0, %s87
    $region4: #{tpu_custom_call.1} parent=1 // loop_header_branch
      %15 = sbr.rel (%p13) target = $region8
    $region5: #{tpu_custom_call.1} parent=1 // loop_body
      %s17 = ssub.s32 %s12, 1
      %s18 = ssub.s32 %s12, 2
      %s25 = sadd.s32 1, %s20
      %p26 = scmp.ge.s32.totalorder %s25, 1
      %s27 = scalar_select %p26, 0, %s25
      %s28 = sadd.s32 1, %s19
      %s29 = scalar_select %p26, %s28, %s19
      %p30 = scmp.ge.s32.totalorder %s29, 2
      %s31 = scalar_select %p30, 0, %s29
      %s32 = ssub.s32 %s19, %s31
      %s33 = ssub.s32 %s20, %s27
      %s34 = sor.u32 %s32, %s33
      %p35 = scmp.eq.s32.totalorder %s34, 0
      %s37 = sadd.s32 %s36, 1
      %s38 = scalar_select %p35, %s36, %s37
      %p41 = pneg %p35
      %p42 = scmp.eq.s32.totalorder %s12, 1
      %p43 = por %p41, %p42
      %p44 = scmp.ne.s32.totalorder %s36, %s39
      %p45 = scmp.eq.s32.totalorder %s12, 0
      %p46 = por %p44, %p45
      %p47 = scmp.ne.s32.totalorder %s36, %s39
      %p48 = scmp.eq.s32.totalorder %s17, 1
      %p49 = por %p47, %p48
      %p50 = scmp.ne.s32.totalorder %s39, %s40
      %p51 = scmp.eq.s32.totalorder %s17, 0
      %p52 = por %p50, %p51
      %p53 = scmp.ne.s32.totalorder %s39, %s40
      %p54 = scmp.eq.s32.totalorder %s18, 1
      %p55 = por %p53, %p54
      %p57 = scmp.ne.s32.totalorder %s40, %s56
      %p58 = scmp.eq.s32.totalorder %s18, 0
      %p59 = por %p57, %p58
      %s61 = sadd.s32 %s60, 1
      %p64 = scmp.eq.s32.totalorder %s12, 1
      %p65 = scmp.ne.s32.totalorder %s60, %s62
      %p66 = scmp.eq.s32.totalorder %s12, 0
      %p67 = por %p65, %p66
      %p68 = scmp.ne.s32.totalorder %s60, %s62
      %p69 = scmp.eq.s32.totalorder %s17, 1
      %p70 = por %p68, %p69
      %p71 = scmp.ne.s32.totalorder %s62, %s63
      %p72 = scmp.eq.s32.totalorder %s17, 0
      %p73 = por %p71, %p72
      %p74 = scmp.ne.s32.totalorder %s62, %s63
      %p75 = scmp.eq.s32.totalorder %s18, 1
      %p76 = por %p74, %p75
      %p78 = scmp.ne.s32.totalorder %s63, %s77
      %p79 = scmp.eq.s32.totalorder %s18, 0
      %p80 = por %p78, %p79
      %s81 = ssub.s32 %s19, %s31
      %p82 = scmp.eq.s32.totalorder %s81, 0
      %s84 = sadd.s32 %s83, 1
      %s85 = scalar_select %p82, %s83, %s84
      %p88 = pneg %p82
      %p89 = scmp.eq.s32.totalorder %s12, 1
      %p90 = por %p88, %p89
      %p91 = scmp.ne.s32.totalorder %s83, %s86
      %p92 = scmp.eq.s32.totalorder %s12, 0
      %p93 = por %p91, %p92
      %p94 = scmp.ne.s32.totalorder %s83, %s86
      %p95 = scmp.eq.s32.totalorder %s17, 1
      %p96 = por %p94, %p95
      %p97 = scmp.ne.s32.totalorder %s86, %s87
      %p98 = scmp.eq.s32.totalorder %s17, 0
      %p99 = por %p97, %p98
      %p100 = scmp.ne.s32.totalorder %s86, %s87
      %p101 = scmp.eq.s32.totalorder %s18, 1
      %p102 = por %p100, %p101
      %p104 = scmp.ne.s32.totalorder %s87, %s103
      %p105 = scmp.eq.s32.totalorder %s18, 0
      %p106 = por %p104, %p105
      %p107 = scmp.le.s32.totalorder 1, %s12
      %p108 = scmp.lt.s32.totalorder %s12, 3
      %p109 = pnand %p107, %p108
      %p110 = pneg %p109
      // Predicated region
      $region9: #{tpu_custom_call.1} parent=5 // pred_check
        _
      $region10: #{tpu_custom_call.1} parent=5 // pred_check_branch
        %112 = sbr.rel (%p109) target = $region12
      $region11: #{tpu_custom_call.1} parent=5 // pred_region
        %s113 = ssub.s32 %s12, 1
        // Predicated region
        $region13: #{tpu_custom_call.1} parent=11 // pred_check
          %p114 = pneg %p73
        $region14: #{tpu_custom_call.1} parent=11 // pred_check_branch
          %116 = sbr.rel (%p114) target = $region16
        $region15: #{tpu_custom_call.1} parent=11 // pred_region
          %s118 = ssub.s32 512, 512
          %119 = vsyncadd [#allocation5], %s118
          %s120 = sshll.u32 [#allocation4], 4
          %s121 = int_to_ptr.vmem [resolvable:$true] %s120
          %126 = dma.hbm_to_vmem [thread:$0]  %s1, 512, %s121, [#allocation5], 128, 128, 8
        $region16: #{tpu_custom_call.1} parent=11 // pred_fallthru
          _
      $region12: #{tpu_custom_call.1} parent=5 // pred_fallthru
        _
      %p127 = scmp.lt.s32.totalorder %s12, 2
      // Predicated region
      $region17: #{tpu_custom_call.1} parent=5 // pred_check
        %p128 = pneg %p127
      $region18: #{tpu_custom_call.1} parent=5 // pred_check_branch
        %130 = sbr.rel (%p128) target = $region20
      $region19: #{tpu_custom_call.1} parent=5 // pred_region
        // Predicated region
        $region21: #{tpu_custom_call.1} parent=19 // pred_check
          %p131 = pneg %p46
        $region22: #{tpu_custom_call.1} parent=19 // pred_check_branch
          %133 = sbr.rel (%p131) target = $region24
        $region23: #{tpu_custom_call.1} parent=19 // pred_region
          %s134 = sand.u32 %s36, 1
          %s135 = scalar_lea.sflag [#allocation3], %s134
          %s136 = sand.u32 %s36, 1
          %s137 = smul.addr %s136, 8
          %s138 = scalar_lea.vmem [#allocation2], %s137
          %s140 = ssub.s32 128, 128
          %141 = vsyncadd %s135, %s140
          %s142 = sadd.s32 %s20, %s19
          %s143 = smul.addr %s142, 128
          %s144 = scalar_lea.hbm %s0, %s143
          %s146 = sshll.u32 %s138, 4
          %s147 = int_to_ptr.vmem [resolvable:$true] %s146
          %149 = dma.hbm_to_vmem [thread:$0]  %s144, 128, %s147, %s135
        $region24: #{tpu_custom_call.1} parent=19 // pred_fallthru
          _
      $region20: #{tpu_custom_call.1} parent=5 // pred_fallthru
        _
      %p150 = scmp.le.s32.totalorder 1, %s12
      %p151 = scmp.lt.s32.totalorder %s12, 3
      %p152 = pnand %p150, %p151
      %p153 = pneg %p152
      // Predicated region
      $region25: #{tpu_custom_call.1} parent=5 // pred_check
        _
      $region26: #{tpu_custom_call.1} parent=5 // pred_check_branch
        %155 = sbr.rel (%p152) target = $region28
      $region27: #{tpu_custom_call.1} parent=5 // pred_region
        %s156 = ssub.s32 %s12, 1
        %s157 = sand.u32 %s39, 1
        %s158 = scalar_lea.sflag [#allocation3], %s157
        %s159 = sand.u32 %s39, 1
        %s160 = smul.addr %s159, 8
        %s161 = scalar_lea.vmem [#allocation2], %s160
        // Predicated region
        $region29: #{tpu_custom_call.1} parent=27 // pred_check
          %p162 = pneg %p52
        $region30: #{tpu_custom_call.1} parent=27 // pred_check_branch
          %164 = sbr.rel (%p162) target = $region32
        $region31: #{tpu_custom_call.1} parent=27 // pred_region
          %165 = dma.done %s158, 128
        $region32: #{tpu_custom_call.1} parent=27 // pred_fallthru
          _
        // Predicated region
        $region33: #{tpu_custom_call.1} parent=27 // pred_check
          %p166 = pneg %p73
        $region34: #{tpu_custom_call.1} parent=27 // pred_check_branch
          %168 = sbr.rel (%p166) target = $region36
        $region35: #{tpu_custom_call.1} parent=27 // pred_region
          %169 = dma.done [#allocation5], 512
        $region36: #{tpu_custom_call.1} parent=27 // pred_fallthru
          _
        %s170 = sand.u32 %s39, 1
        %s171 = scalar_lea.sflag [#allocation3], %s170
        %s172 = sand.u32 %s39, 1
        %s173 = smul.addr %s172, 8
        %s174 = scalar_lea.vmem [#allocation2], %s173
        %p175 = pneg %p52
        %p176 = pneg %p49
        %p177 = pneg %p73
        %p178 = pneg %p70
        %p179 = pneg %p99
        %p180 = pneg %p96
        %p181 = scmp.lt.s32.totalorder %s21, 1
        %s182 = scalar_select %p181, %s21, 1
        %s183 = smul.addr %s182, 40
        %s184 = smul.addr %s183, 8
        %s185 = scalar_lea.vmem %s2, %s184
        %p186 = scmp.lt.s32.totalorder %s21, 1
        %s187 = scalar_select %p186, %s21, 1
        %s188 = smul.addr %s187, 40
        %s189 = smul.addr %s188, 8
        %s190 = scalar_lea.vmem %s2, %s189
        %p191 = scmp.eq.s32.totalorder %s22, 0
        // Predicated region
        $region37: #{tpu_custom_call.1} parent=27 // pred_check
          %p192 = pneg %p191
        $region38: #{tpu_custom_call.1} parent=27 // pred_check_branch
          %194 = sbr.rel (%p192) target = $region40
        $region39: #{tpu_custom_call.1} parent=27 // pred_region
          %vm195 = vcmask 72704
          %196 = vst.msk [vmem:[%s190] sm:$0xff] %vm195, 0.0
          %197 = vst.msk [vmem:[%s190 + $0x8] sm:$0xff] %vm195, 0.0
          %198 = vst.msk [vmem:[%s190 + $0x10] sm:$0xff] %vm195, 0.0
          %199 = vst.msk [vmem:[%s190 + $0x18] sm:$0xff] %vm195, 0.0
          %200 = vst.msk [vmem:[%s190 + $0x20] sm:$0xff] %vm195, 0.0
          %201 = vst.msk [vmem:[%s190 + $0x28] sm:$0xff] %vm195, 0.0
          %202 = vst.msk [vmem:[%s190 + $0x30] sm:$0xff] %vm195, 0.0
          %203 = vst.msk [vmem:[%s190 + $0x38] sm:$0xff] %vm195, 0.0
          %204 = vst.msk [vmem:[%s190 + $0x40] sm:$0xff] %vm195, 0.0
          %205 = vst.msk [vmem:[%s190 + $0x48] sm:$0xff] %vm195, 0.0
          %206 = vst.msk [vmem:[%s190 + $0x50] sm:$0xff] %vm195, 0.0
          %207 = vst.msk [vmem:[%s190 + $0x58] sm:$0xff] %vm195, 0.0
          %208 = vst.msk [vmem:[%s190 + $0x60] sm:$0xff] %vm195, 0.0
          %209 = vst.msk [vmem:[%s190 + $0x68] sm:$0xff] %vm195, 0.0
          %210 = vst.msk [vmem:[%s190 + $0x70] sm:$0xff] %vm195, 0.0
          %211 = vst.msk [vmem:[%s190 + $0x78] sm:$0xff] %vm195, 0.0
          %212 = vst.msk [vmem:[%s190 + $0x80] sm:$0xff] %vm195, 0.0
          %213 = vst.msk [vmem:[%s190 + $0x88] sm:$0xff] %vm195, 0.0
          %214 = vst.msk [vmem:[%s190 + $0x90] sm:$0xff] %vm195, 0.0
          %215 = vst.msk [vmem:[%s190 + $0x98] sm:$0xff] %vm195, 0.0
          %216 = vst.msk [vmem:[%s190 + $0xa0] sm:$0xff] %vm195, 0.0
          %217 = vst.msk [vmem:[%s190 + $0xa8] sm:$0xff] %vm195, 0.0
          %218 = vst.msk [vmem:[%s190 + $0xb0] sm:$0xff] %vm195, 0.0
          %219 = vst.msk [vmem:[%s190 + $0xb8] sm:$0xff] %vm195, 0.0
          %220 = vst.msk [vmem:[%s190 + $0xc0] sm:$0xff] %vm195, 0.0
          %221 = vst.msk [vmem:[%s190 + $0xc8] sm:$0xff] %vm195, 0.0
          %222 = vst.msk [vmem:[%s190 + $0xd0] sm:$0xff] %vm195, 0.0
          %223 = vst.msk [vmem:[%s190 + $0xd8] sm:$0xff] %vm195, 0.0
          %224 = vst.msk [vmem:[%s190 + $0xe0] sm:$0xff] %vm195, 0.0
          %225 = vst.msk [vmem:[%s190 + $0xe8] sm:$0xff] %vm195, 0.0
          %226 = vst.msk [vmem:[%s190 + $0xf0] sm:$0xff] %vm195, 0.0
          %227 = vst.msk [vmem:[%s190 + $0xf8] sm:$0xff] %vm195, 0.0
          %228 = vst.msk [vmem:[%s190 + $0x100] sm:$0xff] %vm195, 0.0
          %229 = vst.msk [vmem:[%s190 + $0x108] sm:$0xff] %vm195, 0.0
          %230 = vst.msk [vmem:[%s190 + $0x110] sm:$0xff] %vm195, 0.0
          %231 = vst.msk [vmem:[%s190 + $0x118] sm:$0xff] %vm195, 0.0
          %232 = vst.msk [vmem:[%s190 + $0x120] sm:$0xff] %vm195, 0.0
          %233 = vst.msk [vmem:[%s190 + $0x128] sm:$0xff] %vm195, 0.0
          %234 = vst.msk [vmem:[%s190 + $0x130] sm:$0xff] %vm195, 0.0
          %235 = vst.msk [vmem:[%s190 + $0x138] sm:$0xff] %vm195, 0.0
        $region40: #{tpu_custom_call.1} parent=27 // pred_fallthru
          _
        %v236 = vld [vmem:[%s161] sm:$0xff]
        %v237 = vld [vmem:[#allocation4] sm:$0xff]
        %v238 = vld [vmem:[#allocation4 + $0x8] sm:$0xff]
        %v239 = vld [vmem:[#allocation4 + $0x10] sm:$0xff]
        %v240 = vld [vmem:[#allocation4 + $0x18] sm:$0xff]
        %vm241 = vcmask 261120
        %v243 = vsel %vm241, %v236, 0
        %245 = vmatprep.subr.mxu0 0.0
        %246 = vmatpush1.msra.mxu0 %v237
        %247 = vmatprep.subr.mxu0 0.0
        %248 = vmatpush1.msra.mxu0 %v238
        %249 = vmatprep.subr.mxu0 0.0
        %250 = vmatpush1.msra.mxu0 %v239
        %251 = vmatprep.subr.mxu0 0.0
        %252 = vmatpush1.msra.mxu0 %v240
        %253 = vmatprep.subr.mxu0 0.0
        %254 = vmatpush1.msra.mxu0 0.0
        %255 = vmatprep.subr.mxu0 0.0
        %256 = vmatpush1.msra.mxu0 0.0
        %257 = vmatprep.subr.mxu0 0.0
        %258 = vmatpush1.msra.mxu0 0.0
        %259 = vmatprep.subr.mxu0 0.0
        %260 = vmatpush1.msra.mxu0 0.0
        %261 = vmatprep.subr.mxu0 0.0
        %262 = vmatpush1.msra.mxu0 0.0
        %263 = vmatprep.subr.mxu0 0.0
        %264 = vmatpush1.msra.mxu0 0.0
        %265 = vmatprep.subr.mxu0 0.0
        %266 = vmatpush1.msra.mxu0 0.0
        %267 = vmatprep.subr.mxu0 0.0
        %268 = vmatpush1.msra.mxu0 0.0
        %269 = vmatprep.subr.mxu0 0.0
        %270 = vmatpush1.msra.mxu0 0.0
        %271 = vmatprep.subr.mxu0 0.0
        %272 = vmatpush1.msra.mxu0 0.0
        %273 = vmatprep.subr.mxu0 0.0
        %274 = vmatpush1.msra.mxu0 0.0
        %275 = vmatprep.subr.mxu0 0.0
        %276 = vmatpush1.msra.mxu0 0.0
        %277 = vmatprep.subr.mxu0 0.0
        %278 = vmatpush1.msra.mxu0 0.0
        %279 = vmatprep.subr.mxu0 0.0
        %280 = vmatpush1.msra.mxu0 0.0
        %281 = vmatprep.subr.mxu0 0.0
        %282 = vmatpush1.msra.mxu0 0.0
        %283 = vmatprep.subr.mxu0 0.0
        %284 = vmatpush1.msra.mxu0 0.0
        %285 = vmatprep.subr.mxu0 0.0
        %286 = vmatpush1.msra.mxu0 0.0
        %287 = vmatprep.subr.mxu0 0.0
        %288 = vmatpush1.msra.mxu0 0.0
        %289 = vmatprep.subr.mxu0 0.0
        %290 = vmatpush1.msra.mxu0 0.0
        %291 = vmatprep.subr.mxu0 0.0
        %292 = vmatpush1.msra.mxu0 0.0
        %293 = vmatprep.subr.mxu0 0.0
        %294 = vmatpush1.msra.mxu0 0.0
        %295 = vmatprep.subr.mxu0 0.0
        %296 = vmatpush1.msra.mxu0 0.0
        %297 = vmatprep.subr.mxu0 0.0
        %298 = vmatpush1.msra.mxu0 0.0
        %299 = vmatprep.subr.mxu0 0.0
        %300 = vmatpush1.msra.mxu0 0.0
        %301 = vmatprep.subr.mxu0 0.0
        %302 = vmatpush1.msra.mxu0 0.0
        %303 = vmatprep.subr.mxu0 0.0
        %304 = vmatpush1.msra.mxu0 0.0
        %305 = vmatprep.subr.mxu0 0.0
        %306 = vmatpush1.msra.mxu0 0.0
        %307 = vmatprep.subr.mxu0 0.0
        %308 = vmatpush1.msra.mxu0 0.0
        %309 = vmatprep.mubr.f32.mxu0 0.0
        %310 = vmatmul.mubr.f32.gmra.mrb[0].mxu0 %v243
        %v311 = vpop.f32.mrb[0].mxu0
        %v312 = vadd.f32 0.0, %v311
        %v313 = vpop.f32.mrb[0].mxu0
        %314 = vdwg.mxu0
        %316 = vrot.lane.b32.xlu0 %v312, 96
        %v317 = vpop.permute.xlu0 %316
        %vm319 = vcmask 64512
        %v320 = vsel %vm319, %v317, 1.0
        %v321 = vlaneseq
        %v322 = vshrl.u32 %v321, 7
        %v323 = vsub.s32 0, %v322
        %v324 = vrot.slane %v312, %v323
        %326 = vbcast.lane.b32.xlu0 %v324, 256
        %v327 = vpop.permute.xlu0 %326
        %v328 = vlaneseq
        %v329 = vshrl.u32 %v328, 7
        %v330 = vsub.s32 1, %v329
        %v331 = vrot.slane %v312, %v330
        %333 = vbcast.lane.b32.xlu0 %v331, 256
        %v334 = vpop.permute.xlu0 %333
        %v335 = vlaneseq
        %v336 = vshrl.u32 %v335, 7
        %v337 = vsub.s32 2, %v336
        %v338 = vrot.slane %v312, %v337
        %340 = vbcast.lane.b32.xlu0 %v338, 256
        %v341 = vpop.permute.xlu0 %340
        %v342 = vlaneseq
        %v343 = vshrl.u32 %v342, 7
        %v344 = vsub.s32 3, %v343
        %v345 = vrot.slane %v312, %v344
        %347 = vbcast.lane.b32.xlu0 %v345, 256
        %v348 = vpop.permute.xlu0 %347
        %v349 = vlaneseq
        %v350 = vshrl.u32 %v349, 7
        %v351 = vsub.s32 4, %v350
        %v352 = vrot.slane %v312, %v351
        %354 = vbcast.lane.b32.xlu0 %v352, 256
        %v355 = vpop.permute.xlu0 %354
        %v356 = vlaneseq
        %v357 = vshrl.u32 %v356, 7
        %v358 = vsub.s32 5, %v357
        %v359 = vrot.slane %v312, %v358
        %361 = vbcast.lane.b32.xlu0 %v359, 256
        %v362 = vpop.permute.xlu0 %361
        %v363 = vlaneseq
        %v364 = vshrl.u32 %v363, 7
        %v365 = vsub.s32 6, %v364
        %v366 = vrot.slane %v312, %v365
        %368 = vbcast.lane.b32.xlu0 %v366, 256
        %v369 = vpop.permute.xlu0 %368
        %v370 = vlaneseq
        %v371 = vshrl.u32 %v370, 7
        %v372 = vsub.s32 7, %v371
        %v373 = vrot.slane %v312, %v372
        %375 = vbcast.lane.b32.xlu0 %v373, 256
        %v376 = vpop.permute.xlu0 %375
        %v377 = vcombine.high %v312, %v312
        %v379 = vunpack.c.l.s4 1966171168
        %v380 = vunpack.c.0.s8 %v379
        %v381 = vlaneseq
        %v382 = vshrl.u32 %v381, 7
        %v383 = vsub.s32 %v380, %v382
        %v384 = vrot.slane %v312, %v383
        %v386 = vunpack.c.l.s4 1966171168
        %v387 = vunpack.c.0.s8 %v386
        %v388 = vlaneseq
        %v389 = vshrl.u32 %v388, 7
        %v390 = vsub.s32 %v387, %v389
        %v391 = vrot.slane %v377, %v390
        %v392 = vcombine.high %v384, %v384
        %v393 = vcombine.high %v391, %v391
        %v395 = vunpack.c.l.s4 1966171168
        %v396 = vunpack.c.0.s8 %v395
        %v397 = vlaneseq
        %v398 = vshrl.u32 %v397, 7
        %v399 = vsub.s32 %v396, %v398
        %v400 = vrot.slane %v384, %v399
        %v402 = vunpack.c.l.s4 1966171168
        %v403 = vunpack.c.0.s8 %v402
        %v404 = vlaneseq
        %v405 = vshrl.u32 %v404, 7
        %v406 = vsub.s32 %v403, %v405
        %v407 = vrot.slane %v391, %v406
        %v409 = vunpack.c.l.s4 1966171168
        %v410 = vunpack.c.0.s8 %v409
        %v411 = vlaneseq
        %v412 = vshrl.u32 %v411, 7
        %v413 = vsub.s32 %v410, %v412
        %v414 = vrot.slane %v392, %v413
        %v416 = vunpack.c.l.s4 1966171168
        %v417 = vunpack.c.0.s8 %v416
        %v418 = vlaneseq
        %v419 = vshrl.u32 %v418, 7
        %v420 = vsub.s32 %v417, %v419
        %v421 = vrot.slane %v393, %v420
        %v422 = vcombine.high %v400, %v400
        %v423 = vcombine.high %v407, %v407
        %v424 = vcombine.high %v414, %v414
        %v425 = vcombine.high %v421, %v421
        %v426 = vlaneseq
        %v427 = vshrl.u32 %v426, 7
        %v428 = vsub.s32 0, %v427
        %v429 = vrot.slane %v400, %v428
        %v430 = vlaneseq
        %v431 = vshrl.u32 %v430, 7
        %v432 = vsub.s32 0, %v431
        %v433 = vrot.slane %v414, %v432
        %v434 = vlaneseq
        %v435 = vshrl.u32 %v434, 7
        %v436 = vsub.s32 0, %v435
        %v437 = vrot.slane %v422, %v436
        %v438 = vlaneseq
        %v439 = vshrl.u32 %v438, 7
        %v440 = vsub.s32 0, %v439
        %v441 = vrot.slane %v424, %v440
        %v442 = vlaneseq
        %v443 = vshrl.u32 %v442, 7
        %v444 = vsub.s32 0, %v443
        %v445 = vrot.slane %v407, %v444
        %v446 = vlaneseq
        %v447 = vshrl.u32 %v446, 7
        %v448 = vsub.s32 0, %v447
        %v449 = vrot.slane %v421, %v448
        %v450 = vlaneseq
        %v451 = vshrl.u32 %v450, 7
        %v452 = vsub.s32 0, %v451
        %v453 = vrot.slane %v423, %v452
        %v454 = vlaneseq
        %v455 = vshrl.u32 %v454, 7
        %v456 = vsub.s32 0, %v455
        %v457 = vrot.slane %v425, %v456
        %v466 = vmul.f32 %v327, %v429
        %v467 = vmul.f32 %v334, %v433
        %v468 = vmul.f32 %v341, %v437
        %v469 = vmul.f32 %v348, %v441
        %v470 = vmul.f32 %v355, %v445
        %v471 = vmul.f32 %v362, %v449
        %v472 = vmul.f32 %v369, %v453
        %v473 = vmul.f32 %v376, %v457
        %v474 = vcombine.low %v466, %v468
        %v475 = vcombine.high %v466, %v468
        %v477 = vunpack.c.l.s4 1983009808
        %v478 = vunpack.c.0.s8 %v477
        %v479 = vlaneseq
        %v480 = vshrl.u32 %v479, 7
        %v481 = vsub.s32 %v478, %v480
        %v482 = vrot.slane %v474, %v481
        %v484 = vunpack.c.l.s4 1983009808
        %v485 = vunpack.c.0.s8 %v484
        %v486 = vlaneseq
        %v487 = vshrl.u32 %v486, 7
        %v488 = vsub.s32 %v485, %v487
        %v489 = vrot.slane %v475, %v488
        %v490 = vcombine.low %v467, %v469
        %v491 = vcombine.high %v467, %v469
        %v493 = vunpack.c.l.s4 1983009808
        %v494 = vunpack.c.0.s8 %v493
        %v495 = vlaneseq
        %v496 = vshrl.u32 %v495, 7
        %v497 = vsub.s32 %v494, %v496
        %v498 = vrot.slane %v490, %v497
        %v500 = vunpack.c.l.s4 1983009808
        %v501 = vunpack.c.0.s8 %v500
        %v502 = vlaneseq
        %v503 = vshrl.u32 %v502, 7
        %v504 = vsub.s32 %v501, %v503
        %v505 = vrot.slane %v491, %v504
        %v506 = vcombine.low %v470, %v472
        %v507 = vcombine.high %v470, %v472
        %v509 = vunpack.c.l.s4 1983009808
        %v510 = vunpack.c.0.s8 %v509
        %v511 = vlaneseq
        %v512 = vshrl.u32 %v511, 7
        %v513 = vsub.s32 %v510, %v512
        %v514 = vrot.slane %v506, %v513
        %v516 = vunpack.c.l.s4 1983009808
        %v517 = vunpack.c.0.s8 %v516
        %v518 = vlaneseq
        %v519 = vshrl.u32 %v518, 7
        %v520 = vsub.s32 %v517, %v519
        %v521 = vrot.slane %v507, %v520
        %v522 = vcombine.low %v471, %v473
        %v523 = vcombine.high %v471, %v473
        %v525 = vunpack.c.l.s4 1983009808
        %v526 = vunpack.c.0.s8 %v525
        %v527 = vlaneseq
        %v528 = vshrl.u32 %v527, 7
        %v529 = vsub.s32 %v526, %v528
        %v530 = vrot.slane %v522, %v529
        %v532 = vunpack.c.l.s4 1983009808
        %v533 = vunpack.c.0.s8 %v532
        %v534 = vlaneseq
        %v535 = vshrl.u32 %v534, 7
        %v536 = vsub.s32 %v533, %v535
        %v537 = vrot.slane %v523, %v536
        %v538 = vcombine.low %v482, %v498
        %v539 = vcombine.high %v482, %v498
        %v541 = vunpack.c.l.s4 1934713408
        %v542 = vunpack.c.0.s8 %v541
        %v543 = vlaneseq
        %v544 = vshrl.u32 %v543, 7
        %v545 = vsub.s32 %v542, %v544
        %v546 = vrot.slane %v538, %v545
        %v548 = vunpack.c.l.s4 1934713408
        %v549 = vunpack.c.0.s8 %v548
        %v550 = vlaneseq
        %v551 = vshrl.u32 %v550, 7
        %v552 = vsub.s32 %v549, %v551
        %v553 = vrot.slane %v539, %v552
        %v554 = vcombine.low %v489, %v505
        %v555 = vcombine.high %v489, %v505
        %v557 = vunpack.c.l.s4 1934713408
        %v558 = vunpack.c.0.s8 %v557
        %v559 = vlaneseq
        %v560 = vshrl.u32 %v559, 7
        %v561 = vsub.s32 %v558, %v560
        %v562 = vrot.slane %v554, %v561
        %v564 = vunpack.c.l.s4 1934713408
        %v565 = vunpack.c.0.s8 %v564
        %v566 = vlaneseq
        %v567 = vshrl.u32 %v566, 7
        %v568 = vsub.s32 %v565, %v567
        %v569 = vrot.slane %v555, %v568
        %v570 = vcombine.low %v514, %v530
        %v571 = vcombine.high %v514, %v530
        %v573 = vunpack.c.l.s4 1934713408
        %v574 = vunpack.c.0.s8 %v573
        %v575 = vlaneseq
        %v576 = vshrl.u32 %v575, 7
        %v577 = vsub.s32 %v574, %v576
        %v578 = vrot.slane %v570, %v577
        %v580 = vunpack.c.l.s4 1934713408
        %v581 = vunpack.c.0.s8 %v580
        %v582 = vlaneseq
        %v583 = vshrl.u32 %v582, 7
        %v584 = vsub.s32 %v581, %v583
        %v585 = vrot.slane %v571, %v584
        %v586 = vcombine.low %v521, %v537
        %v587 = vcombine.high %v521, %v537
        %v589 = vunpack.c.l.s4 1934713408
        %v590 = vunpack.c.0.s8 %v589
        %v591 = vlaneseq
        %v592 = vshrl.u32 %v591, 7
        %v593 = vsub.s32 %v590, %v592
        %v594 = vrot.slane %v586, %v593
        %v596 = vunpack.c.l.s4 1934713408
        %v597 = vunpack.c.0.s8 %v596
        %v598 = vlaneseq
        %v599 = vshrl.u32 %v598, 7
        %v600 = vsub.s32 %v597, %v599
        %v601 = vrot.slane %v587, %v600
        %v602 = vcombine.low %v546, %v578
        %v603 = vcombine.high %v546, %v578
        %v604 = vcombine.low %v553, %v585
        %v605 = vcombine.high %v553, %v585
        %v606 = vcombine.low %v562, %v594
        %v607 = vcombine.high %v562, %v594
        %v608 = vcombine.low %v569, %v601
        %v609 = vcombine.high %v569, %v601
        %611 = vrot.lane.b32.xlu0 %v603, 8
        %v612 = vpop.permute.xlu0 %611
        %615 = vrot.lane.b32.xlu0 %v604, 16
        %v616 = vpop.permute.xlu0 %615
        %619 = vrot.lane.b32.xlu0 %v605, 24
        %v620 = vpop.permute.xlu0 %619
        %623 = vrot.lane.b32.xlu0 %v606, 32
        %v624 = vpop.permute.xlu0 %623
        %627 = vrot.lane.b32.xlu0 %v607, 40
        %v628 = vpop.permute.xlu0 %627
        %631 = vrot.lane.b32.xlu0 %v608, 48
        %v632 = vpop.permute.xlu0 %631
        %635 = vrot.lane.b32.xlu0 %v609, 56
        %v636 = vpop.permute.xlu0 %635
        %v638 = vsel %vm319, %v602, %v612
        %vm639 = vcmask 130048
        %v640 = vsel %vm639, %v638, %v616
        %vm641 = vcmask 195584
        %v642 = vsel %vm641, %v640, %v620
        %v643 = vsel %vm241, %v642, %v624
        %vm644 = vcmask 326656
        %v645 = vsel %vm644, %v643, %v628
        %vm646 = vcmask 392192
        %v647 = vsel %vm646, %v645, %v632
        %vm648 = vcmask 457728
        %v649 = vsel %vm648, %v647, %v636
        %vm650 = vcmask 72704
        %v651 = vsel %vm650, %v320, 0.0
        %v652 = vrot.slane %v651, 4
        %v653 = vadd.f32 %v651, %v652
        %v654 = vrot.slane %v653, 2
        %v655 = vadd.f32 %v653, %v654
        %v656 = vrot.slane %v655, 1
        %v657 = vadd.f32 %v655, %v656
        %658 = vxpose.xlu0.b32.start [1/16] %v312, 128
        %659 = vxpose.xlu0.b32.cont [2/16] 0.0, 128
        %660 = vxpose.xlu0.b32.cont [3/16] 0.0, 128
        %661 = vxpose.xlu0.b32.cont [4/16] 0.0, 128
        %662 = vxpose.xlu0.b32.cont [5/16] 0.0, 128
        %663 = vxpose.xlu0.b32.cont [6/16] 0.0, 128
        %664 = vxpose.xlu0.b32.cont [7/16] 0.0, 128
        %665 = vxpose.xlu0.b32.cont [8/16] 0.0, 128
        %666 = vxpose.xlu0.b32.cont [9/16] 0.0, 128
        %667 = vxpose.xlu0.b32.cont [10/16] 0.0, 128
        %668 = vxpose.xlu0.b32.cont [11/16] 0.0, 128
        %669 = vxpose.xlu0.b32.cont [12/16] 0.0, 128
        %670 = vxpose.xlu0.b32.cont [13/16] 0.0, 128
        %671 = vxpose.xlu0.b32.cont [14/16] 0.0, 128
        %672 = vxpose.xlu0.b32.cont [15/16] 0.0, 128
        %673 = vxpose.xlu0.b32.end [16/16] 0.0, 128
        %v674 = vpop.trf.xlu0
        %v675 = vpop.trf.xlu0
        %v676 = vpop.trf.xlu0
        %v677 = vpop.trf.xlu0
        %v678 = vpop.trf.xlu0
        %v679 = vpop.trf.xlu0
        %v680 = vpop.trf.xlu0
        %v681 = vpop.trf.xlu0
        %v682 = vpop.trf.xlu0
        %v683 = vpop.trf.xlu0
        %v684 = vpop.trf.xlu0
        %v685 = vpop.trf.xlu0
        %v686 = vpop.trf.xlu0
        %v687 = vpop.trf.xlu0
        %v688 = vpop.trf.xlu0
        %v689 = vpop.trf.xlu0
        %v691 = vsel %vm319, %v674, 0
        %693 = vmatprep.subr.mxu0 0.0
        %694 = vmatpush1.msra.mxu0 %v320
        %695 = vmatprep.subr.mxu0 0.0
        %696 = vmatpush1.msra.mxu0 0.0
        %697 = vmatprep.subr.mxu0 0.0
        %698 = vmatpush1.msra.mxu0 0.0
        %699 = vmatprep.subr.mxu0 0.0
        %700 = vmatpush1.msra.mxu0 0.0
        %701 = vmatprep.subr.mxu0 0.0
        %702 = vmatpush1.msra.mxu0 0.0
        %703 = vmatprep.subr.mxu0 0.0
        %704 = vmatpush1.msra.mxu0 0.0
        %705 = vmatprep.subr.mxu0 0.0
        %706 = vmatpush1.msra.mxu0 0.0
        %707 = vmatprep.subr.mxu0 0.0
        %708 = vmatpush1.msra.mxu0 0.0
        %709 = vmatprep.subr.mxu0 0.0
        %710 = vmatpush1.msra.mxu0 0.0
        %711 = vmatprep.subr.mxu0 0.0
        %712 = vmatpush1.msra.mxu0 0.0
        %713 = vmatprep.subr.mxu0 0.0
        %714 = vmatpush1.msra.mxu0 0.0
        %715 = vmatprep.subr.mxu0 0.0
        %716 = vmatpush1.msra.mxu0 0.0
        %717 = vmatprep.subr.mxu0 0.0
        %718 = vmatpush1.msra.mxu0 0.0
        %719 = vmatprep.subr.mxu0 0.0
        %720 = vmatpush1.msra.mxu0 0.0
        %721 = vmatprep.subr.mxu0 0.0
        %722 = vmatpush1.msra.mxu0 0.0
        %723 = vmatprep.subr.mxu0 0.0
        %724 = vmatpush1.msra.mxu0 0.0
        %725 = vmatprep.subr.mxu0 0.0
        %726 = vmatpush1.msra.mxu0 0.0
        %727 = vmatprep.subr.mxu0 0.0
        %728 = vmatpush1.msra.mxu0 0.0
        %729 = vmatprep.subr.mxu0 0.0
        %730 = vmatpush1.msra.mxu0 0.0
        %731 = vmatprep.subr.mxu0 0.0
        %732 = vmatpush1.msra.mxu0 0.0
        %733 = vmatprep.subr.mxu0 0.0
        %734 = vmatpush1.msra.mxu0 0.0
        %735 = vmatprep.subr.mxu0 0.0
        %736 = vmatpush1.msra.mxu0 0.0
        %737 = vmatprep.subr.mxu0 0.0
        %738 = vmatpush1.msra.mxu0 0.0
        %739 = vmatprep.subr.mxu0 0.0
        %740 = vmatpush1.msra.mxu0 0.0
        %741 = vmatprep.subr.mxu0 0.0
        %742 = vmatpush1.msra.mxu0 0.0
        %743 = vmatprep.subr.mxu0 0.0
        %744 = vmatpush1.msra.mxu0 0.0
        %745 = vmatprep.subr.mxu0 0.0
        %746 = vmatpush1.msra.mxu0 0.0
        %747 = vmatprep.subr.mxu0 0.0
        %748 = vmatpush1.msra.mxu0 0.0
        %749 = vmatprep.subr.mxu0 0.0
        %750 = vmatpush1.msra.mxu0 0.0
        %751 = vmatprep.subr.mxu0 0.0
        %752 = vmatpush1.msra.mxu0 0.0
        %753 = vmatprep.subr.mxu0 0.0
        %754 = vmatpush1.msra.mxu0 0.0
        %755 = vmatprep.subr.mxu0 0.0
        %756 = vmatpush1.msra.mxu0 0.0
        %757 = vmatprep.mubr.f32.mxu0 0.0
        %758 = vmatmul.mubr.f32.gmra.mrb[0].mxu0 %v691
        %v759 = vpop.f32.mrb[0].mxu0
        %v760 = vadd.f32 0.0, %v759
        %v761 = vpop.f32.mrb[0].mxu0
        %762 = vdwg.mxu0
        %763 = vxpose.xlu0.b32.start [1/16] %v649, 128
        %764 = vxpose.xlu0.b32.cont [2/16] 0.0, 128
        %765 = vxpose.xlu0.b32.cont [3/16] 0.0, 128
        %766 = vxpose.xlu0.b32.cont [4/16] 0.0, 128
        %767 = vxpose.xlu0.b32.cont [5/16] 0.0, 128
        %768 = vxpose.xlu0.b32.cont [6/16] 0.0, 128
        %769 = vxpose.xlu0.b32.cont [7/16] 0.0, 128
        %770 = vxpose.xlu0.b32.cont [8/16] 0.0, 128
        %771 = vxpose.xlu0.b32.cont [9/16] 0.0, 128
        %772 = vxpose.xlu0.b32.cont [10/16] 0.0, 128
        %773 = vxpose.xlu0.b32.cont [11/16] 0.0, 128
        %774 = vxpose.xlu0.b32.cont [12/16] 0.0, 128
        %775 = vxpose.xlu0.b32.cont [13/16] 0.0, 128
        %776 = vxpose.xlu0.b32.cont [14/16] 0.0, 128
        %777 = vxpose.xlu0.b32.cont [15/16] 0.0, 128
        %778 = vxpose.xlu0.b32.end [16/16] 0.0, 128
        %v779 = vpop.trf.xlu0
        %v780 = vpop.trf.xlu0
        %v781 = vpop.trf.xlu0
        %v782 = vpop.trf.xlu0
        %v783 = vpop.trf.xlu0
        %v784 = vpop.trf.xlu0
        %v785 = vpop.trf.xlu0
        %v786 = vpop.trf.xlu0
        %v787 = vpop.trf.xlu0
        %v788 = vpop.trf.xlu0
        %v789 = vpop.trf.xlu0
        %v790 = vpop.trf.xlu0
        %v791 = vpop.trf.xlu0
        %v792 = vpop.trf.xlu0
        %v793 = vpop.trf.xlu0
        %v794 = vpop.trf.xlu0
        %v796 = vsel %vm319, %v779, 0
        %v799 = vsel %vm319, %v780, 0
        %v802 = vsel %vm319, %v781, 0
        %v805 = vsel %vm319, %v782, 0
        %v808 = vsel %vm319, %v783, 0
        %v811 = vsel %vm319, %v784, 0
        %v814 = vsel %vm319, %v785, 0
        %v817 = vsel %vm319, %v786, 0
        %819 = vmatprep.subr.mxu0 0.0
        %820 = vmatpush1.msra.mxu0 %v320
        %821 = vmatprep.subr.mxu0 0.0
        %822 = vmatpush1.msra.mxu0 0.0
        %823 = vmatprep.subr.mxu0 0.0
        %824 = vmatpush1.msra.mxu0 0.0
        %825 = vmatprep.subr.mxu0 0.0
        %826 = vmatpush1.msra.mxu0 0.0
        %827 = vmatprep.subr.mxu0 0.0
        %828 = vmatpush1.msra.mxu0 0.0
        %829 = vmatprep.subr.mxu0 0.0
        %830 = vmatpush1.msra.mxu0 0.0
        %831 = vmatprep.subr.mxu0 0.0
        %832 = vmatpush1.msra.mxu0 0.0
        %833 = vmatprep.subr.mxu0 0.0
        %834 = vmatpush1.msra.mxu0 0.0
        %835 = vmatprep.subr.mxu0 0.0
        %836 = vmatpush1.msra.mxu0 0.0
        %837 = vmatprep.subr.mxu0 0.0
        %838 = vmatpush1.msra.mxu0 0.0
        %839 = vmatprep.subr.mxu0 0.0
        %840 = vmatpush1.msra.mxu0 0.0
        %841 = vmatprep.subr.mxu0 0.0
        %842 = vmatpush1.msra.mxu0 0.0
        %843 = vmatprep.subr.mxu0 0.0
        %844 = vmatpush1.msra.mxu0 0.0
        %845 = vmatprep.subr.mxu0 0.0
        %846 = vmatpush1.msra.mxu0 0.0
        %847 = vmatprep.subr.mxu0 0.0
        %848 = vmatpush1.msra.mxu0 0.0
        %849 = vmatprep.subr.mxu0 0.0
        %850 = vmatpush1.msra.mxu0 0.0
        %851 = vmatprep.subr.mxu0 0.0
        %852 = vmatpush1.msra.mxu0 0.0
        %853 = vmatprep.subr.mxu0 0.0
        %854 = vmatpush1.msra.mxu0 0.0
        %855 = vmatprep.subr.mxu0 0.0
        %856 = vmatpush1.msra.mxu0 0.0
        %857 = vmatprep.subr.mxu0 0.0
        %858 = vmatpush1.msra.mxu0 0.0
        %859 = vmatprep.subr.mxu0 0.0
        %860 = vmatpush1.msra.mxu0 0.0
        %861 = vmatprep.subr.mxu0 0.0
        %862 = vmatpush1.msra.mxu0 0.0
        %863 = vmatprep.subr.mxu0 0.0
        %864 = vmatpush1.msra.mxu0 0.0
        %865 = vmatprep.subr.mxu0 0.0
        %866 = vmatpush1.msra.mxu0 0.0
        %867 = vmatprep.subr.mxu0 0.0
        %868 = vmatpush1.msra.mxu0 0.0
        %869 = vmatprep.subr.mxu0 0.0
        %870 = vmatpush1.msra.mxu0 0.0
        %871 = vmatprep.subr.mxu0 0.0
        %872 = vmatpush1.msra.mxu0 0.0
        %873 = vmatprep.subr.mxu0 0.0
        %874 = vmatpush1.msra.mxu0 0.0
        %875 = vmatprep.subr.mxu0 0.0
        %876 = vmatpush1.msra.mxu0 0.0
        %877 = vmatprep.subr.mxu0 0.0
        %878 = vmatpush1.msra.mxu0 0.0
        %879 = vmatprep.subr.mxu0 0.0
        %880 = vmatpush1.msra.mxu0 0.0
        %881 = vmatprep.subr.mxu0 0.0
        %882 = vmatpush1.msra.mxu0 0.0
        %883 = vmatprep.mubr.f32.mxu0 0.0
        %884 = vmatmul.mubr.f32.gmra.mrb[0].mxu0 %v796
        %v885 = vpop.f32.mrb[0].mxu0
        %v886 = vadd.f32 0.0, %v885
        %v887 = vpop.f32.mrb[0].mxu0
        %888 = vmatprep.mubr.f32.mxu0 0.0
        %889 = vmatmul.mubr.f32.gmra.mrb[0].mxu0 %v799
        %v890 = vpop.f32.mrb[0].mxu0
        %v891 = vadd.f32 0.0, %v890
        %v892 = vpop.f32.mrb[0].mxu0
        %893 = vmatprep.mubr.f32.mxu0 0.0
        %894 = vmatmul.mubr.f32.gmra.mrb[0].mxu0 %v802
        %v895 = vpop.f32.mrb[0].mxu0
        %v896 = vadd.f32 0.0, %v895
        %v897 = vpop.f32.mrb[0].mxu0
        %898 = vmatprep.mubr.f32.mxu0 0.0
        %899 = vmatmul.mubr.f32.gmra.mrb[0].mxu0 %v805
        %v900 = vpop.f32.mrb[0].mxu0
        %v901 = vadd.f32 0.0, %v900
        %v902 = vpop.f32.mrb[0].mxu0
        %903 = vmatprep.mubr.f32.mxu0 0.0
        %904 = vmatmul.mubr.f32.gmra.mrb[0].mxu0 %v808
        %v905 = vpop.f32.mrb[0].mxu0
        %v906 = vadd.f32 0.0, %v905
        %v907 = vpop.f32.mrb[0].mxu0
        %908 = vmatprep.mubr.f32.mxu0 0.0
        %909 = vmatmul.mubr.f32.gmra.mrb[0].mxu0 %v811
        %v910 = vpop.f32.mrb[0].mxu0
        %v911 = vadd.f32 0.0, %v910
        %v912 = vpop.f32.mrb[0].mxu0
        %913 = vmatprep.mubr.f32.mxu0 0.0
        %914 = vmatmul.mubr.f32.gmra.mrb[0].mxu0 %v814
        %v915 = vpop.f32.mrb[0].mxu0
        %v916 = vadd.f32 0.0, %v915
        %v917 = vpop.f32.mrb[0].mxu0
        %918 = vmatprep.mubr.f32.mxu0 0.0
        %919 = vmatmul.mubr.f32.gmra.mrb[0].mxu0 %v817
        %v920 = vpop.f32.mrb[0].mxu0
        %v921 = vadd.f32 0.0, %v920
        %v922 = vpop.f32.mrb[0].mxu0
        %923 = vdwg.mxu0
        %v924 = vld [vmem:[%s190] sm:$0x1]
        %v925 = vadd.f32 %v924, %v657
        %vm926 = vcmask 65536
        %927 = vst.msk [vmem:[%s190] sm:$0x1] %vm926, %v925
        %v928 = vld [vmem:[%s190 + $0x8] sm:$0xff]
        %v929 = vadd.f32 %v928, %v760
        %930 = vst.msk [vmem:[%s190 + $0x8] sm:$0xff] %vm650, %v929
        %v931 = vld [vmem:[%s190 + $0x10] sm:$0xff]
        %v932 = vld [vmem:[%s190 + $0x18] sm:$0xff]
        %v933 = vld [vmem:[%s190 + $0x20] sm:$0xff]
        %v934 = vld [vmem:[%s190 + $0x28] sm:$0xff]
        %v935 = vld [vmem:[%s190 + $0x30] sm:$0xff]
        %v936 = vld [vmem:[%s190 + $0x38] sm:$0xff]
        %v937 = vld [vmem:[%s190 + $0x40] sm:$0xff]
        %v938 = vld [vmem:[%s190 + $0x48] sm:$0xff]
        %v939 = vadd.f32 %v931, %v886
        %v940 = vadd.f32 %v932, %v891
        %v941 = vadd.f32 %v933, %v896
        %v942 = vadd.f32 %v934, %v901
        %v943 = vadd.f32 %v935, %v906
        %v944 = vadd.f32 %v936, %v911
        %v945 = vadd.f32 %v937, %v916
        %v946 = vadd.f32 %v938, %v921
        %947 = vst.msk [vmem:[%s190 + $0x10] sm:$0xff] %vm650, %v939
        %948 = vst.msk [vmem:[%s190 + $0x18] sm:$0xff] %vm650, %v940
        %949 = vst.msk [vmem:[%s190 + $0x20] sm:$0xff] %vm650, %v941
        %950 = vst.msk [vmem:[%s190 + $0x28] sm:$0xff] %vm650, %v942
        %951 = vst.msk [vmem:[%s190 + $0x30] sm:$0xff] %vm650, %v943
        %952 = vst.msk [vmem:[%s190 + $0x38] sm:$0xff] %vm650, %v944
        %953 = vst.msk [vmem:[%s190 + $0x40] sm:$0xff] %vm650, %v945
        %954 = vst.msk [vmem:[%s190 + $0x48] sm:$0xff] %vm650, %v946
        %955 = vrot.lane.b32.xlu0 %v312, 88
        %v956 = vpop.permute.xlu0 %955
        %v958 = vsel %vm319, %v956, 1.0
        %s960 = sor.u32 256, 8
        %961 = vbcast.lane.b32.xlu0 %v324, %s960
        %v962 = vpop.permute.xlu0 %961
        %s964 = sor.u32 256, 8
        %965 = vbcast.lane.b32.xlu0 %v331, %s964
        %v966 = vpop.permute.xlu0 %965
        %s968 = sor.u32 256, 8
        %969 = vbcast.lane.b32.xlu0 %v338, %s968
        %v970 = vpop.permute.xlu0 %969
        %s972 = sor.u32 256, 8
        %973 = vbcast.lane.b32.xlu0 %v345, %s972
        %v974 = vpop.permute.xlu0 %973
        %s976 = sor.u32 256, 8
        %977 = vbcast.lane.b32.xlu0 %v352, %s976
        %v978 = vpop.permute.xlu0 %977
        %s980 = sor.u32 256, 8
        %981 = vbcast.lane.b32.xlu0 %v359, %s980
        %v982 = vpop.permute.xlu0 %981
        %s984 = sor.u32 256, 8
        %985 = vbcast.lane.b32.xlu0 %v366, %s984
        %v986 = vpop.permute.xlu0 %985
        %s988 = sor.u32 256, 8
        %989 = vbcast.lane.b32.xlu0 %v373, %s988
        %v990 = vpop.permute.xlu0 %989
        %v991 = vmul.f32 %v962, %v429
        %v992 = vmul.f32 %v966, %v433
        %v993 = vmul.f32 %v970, %v437
        %v994 = vmul.f32 %v974, %v441
        %v995 = vmul.f32 %v978, %v445
        %v996 = vmul.f32 %v982, %v449
        %v997 = vmul.f32 %v986, %v453
        %v998 = vmul.f32 %v990, %v457
        %1007 = vrot.lane.b32.xlu0 %v991, 120
        %v1008 = vpop.permute.xlu0 %1007
        %1009 = vrot.lane.b32.xlu0 %v992, 120
        %v1010 = vpop.permute.xlu0 %1009
        %1011 = vrot.lane.b32.xlu0 %v993, 120
        %v1012 = vpop.permute.xlu0 %1011
        %1013 = vrot.lane.b32.xlu0 %v994, 120
        %v1014 = vpop.permute.xlu0 %1013
        %1015 = vrot.lane.b32.xlu0 %v995, 120
        %v1016 = vpop.permute.xlu0 %1015
        %1017 = vrot.lane.b32.xlu0 %v996, 120
        %v1018 = vpop.permute.xlu0 %1017
        %1019 = vrot.lane.b32.xlu0 %v997, 120
        %v1020 = vpop.permute.xlu0 %1019
        %1021 = vrot.lane.b32.xlu0 %v998, 120
        %v1022 = vpop.permute.xlu0 %1021
        %v1031 = vcombine.low %v1008, %v1012
        %v1032 = vcombine.high %v1008, %v1012
        %v1034 = vunpack.c.l.s4 1983009808
        %v1035 = vunpack.c.0.s8 %v1034
        %v1036 = vlaneseq
        %v1037 = vshrl.u32 %v1036, 7
        %v1038 = vsub.s32 %v1035, %v1037
        %v1039 = vrot.slane %v1031, %v1038
        %v1041 = vunpack.c.l.s4 1983009808
        %v1042 = vunpack.c.0.s8 %v1041
        %v1043 = vlaneseq
        %v1044 = vshrl.u32 %v1043, 7
        %v1045 = vsub.s32 %v1042, %v1044
        %v1046 = vrot.slane %v1032, %v1045
        %v1047 = vcombine.low %v1010, %v1014
        %v1048 = vcombine.high %v1010, %v1014
        %v1050 = vunpack.c.l.s4 1983009808
        %v1051 = vunpack.c.0.s8 %v1050
        %v1052 = vlaneseq
        %v1053 = vshrl.u32 %v1052, 7
        %v1054 = vsub.s32 %v1051, %v1053
        %v1055 = vrot.slane %v1047, %v1054
        %v1057 = vunpack.c.l.s4 1983009808
        %v1058 = vunpack.c.0.s8 %v1057
        %v1059 = vlaneseq
        %v1060 = vshrl.u32 %v1059, 7
        %v1061 = vsub.s32 %v1058, %v1060
        %v1062 = vrot.slane %v1048, %v1061
        %v1063 = vcombine.low %v1016, %v1020
        %v1064 = vcombine.high %v1016, %v1020
        %v1066 = vunpack.c.l.s4 1983009808
        %v1067 = vunpack.c.0.s8 %v1066
        %v1068 = vlaneseq
        %v1069 = vshrl.u32 %v1068, 7
        %v1070 = vsub.s32 %v1067, %v1069
        %v1071 = vrot.slane %v1063, %v1070
        %v1073 = vunpack.c.l.s4 1983009808
        %v1074 = vunpack.c.0.s8 %v1073
        %v1075 = vlaneseq
        %v1076 = vshrl.u32 %v1075, 7
        %v1077 = vsub.s32 %v1074, %v1076
        %v1078 = vrot.slane %v1064, %v1077
        %v1079 = vcombine.low %v1018, %v1022
        %v1080 = vcombine.high %v1018, %v1022
        %v1082 = vunpack.c.l.s4 1983009808
        %v1083 = vunpack.c.0.s8 %v1082
        %v1084 = vlaneseq
        %v1085 = vshrl.u32 %v1084, 7
        %v1086 = vsub.s32 %v1083, %v1085
        %v1087 = vrot.slane %v1079, %v1086
        %v1089 = vunpack.c.l.s4 1983009808
        %v1090 = vunpack.c.0.s8 %v1089
        %v1091 = vlaneseq
        %v1092 = vshrl.u32 %v1091, 7
        %v1093 = vsub.s32 %v1090, %v1092
        %v1094 = vrot.slane %v1080, %v1093
        %v1095 = vcombine.low %v1039, %v1055
        %v1096 = vcombine.high %v1039, %v1055
        %v1098 = vunpack.c.l.s4 1934713408
        %v1099 = vunpack.c.0.s8 %v1098
        %v1100 = vlaneseq
        %v1101 = vshrl.u32 %v1100, 7
        %v1102 = vsub.s32 %v1099, %v1101
        %v1103 = vrot.slane %v1095, %v1102
        %v1105 = vunpack.c.l.s4 1934713408
        %v1106 = vunpack.c.0.s8 %v1105
        %v1107 = vlaneseq
        %v1108 = vshrl.u32 %v1107, 7
        %v1109 = vsub.s32 %v1106, %v1108
        %v1110 = vrot.slane %v1096, %v1109
        %v1111 = vcombine.low %v1046, %v1062
        %v1112 = vcombine.high %v1046, %v1062
        %v1114 = vunpack.c.l.s4 1934713408
        %v1115 = vunpack.c.0.s8 %v1114
        %v1116 = vlaneseq
        %v1117 = vshrl.u32 %v1116, 7
        %v1118 = vsub.s32 %v1115, %v1117
        %v1119 = vrot.slane %v1111, %v1118
        %v1121 = vunpack.c.l.s4 1934713408
        %v1122 = vunpack.c.0.s8 %v1121
        %v1123 = vlaneseq
        %v1124 = vshrl.u32 %v1123, 7
        %v1125 = vsub.s32 %v1122, %v1124
        %v1126 = vrot.slane %v1112, %v1125
        %v1127 = vcombine.low %v1071, %v1087
        %v1128 = vcombine.high %v1071, %v1087
        %v1130 = vunpack.c.l.s4 1934713408
        %v1131 = vunpack.c.0.s8 %v1130
        %v1132 = vlaneseq
        %v1133 = vshrl.u32 %v1132, 7
        %v1134 = vsub.s32 %v1131, %v1133
        %v1135 = vrot.slane %v1127, %v1134
        %v1137 = vunpack.c.l.s4 1934713408
        %v1138 = vunpack.c.0.s8 %v1137
        %v1139 = vlaneseq
        %v1140 = vshrl.u32 %v1139, 7
        %v1141 = vsub.s32 %v1138, %v1140
        %v1142 = vrot.slane %v1128, %v1141
        %v1143 = vcombine.low %v1078, %v1094
        %v1144 = vcombine.high %v1078, %v1094
        %v1146 = vunpack.c.l.s4 1934713408
        %v1147 = vunpack.c.0.s8 %v1146
        %v1148 = vlaneseq
        %v1149 = vshrl.u32 %v1148, 7
        %v1150 = vsub.s32 %v1147, %v1149
        %v1151 = vrot.slane %v1143, %v1150
        %v1153 = vunpack.c.l.s4 1934713408
        %v1154 = vunpack.c.0.s8 %v1153
        %v1155 = vlaneseq
        %v1156 = vshrl.u32 %v1155, 7
        %v1157 = vsub.s32 %v1154, %v1156
        %v1158 = vrot.slane %v1144, %v1157
        %v1159 = vcombine.low %v1103, %v1135
        %v1160 = vcombine.high %v1103, %v1135
        %v1161 = vcombine.low %v1110, %v1142
        %v1162 = vcombine.high %v1110, %v1142
        %v1163 = vcombine.low %v1119, %v1151
        %v1164 = vcombine.high %v1119, %v1151
        %v1165 = vcombine.low %v1126, %v1158
        %v1166 = vcombine.high %v1126, %v1158
        %1168 = vrot.lane.b32.xlu0 %v1160, 8
        %v1169 = vpop.permute.xlu0 %1168
        %1172 = vrot.lane.b32.xlu0 %v1161, 16
        %v1173 = vpop.permute.xlu0 %1172
        %1176 = vrot.lane.b32.xlu0 %v1162, 24
        %v1177 = vpop.permute.xlu0 %1176
        %1180 = vrot.lane.b32.xlu0 %v1163, 32
        %v1181 = vpop.permute.xlu0 %1180
        %1184 = vrot.lane.b32.xlu0 %v1164, 40
        %v1185 = vpop.permute.xlu0 %1184
        %1188 = vrot.lane.b32.xlu0 %v1165, 48
        %v1189 = vpop.permute.xlu0 %1188
        %1192 = vrot.lane.b32.xlu0 %v1166, 56
        %v1193 = vpop.permute.xlu0 %1192
        %v1195 = vsel %vm319, %v1159, %v1169
        %v1196 = vsel %vm639, %v1195, %v1173
        %v1197 = vsel %vm641, %v1196, %v1177
        %v1198 = vsel %vm241, %v1197, %v1181
        %v1199 = vsel %vm644, %v1198, %v1185
        %v1200 = vsel %vm646, %v1199, %v1189
        %v1201 = vsel %vm648, %v1200, %v1193
        %v1202 = vsel %vm650, %v958, 0.0
        %v1203 = vrot.slane %v1202, 4
        %v1204 = vadd.f32 %v1202, %v1203
        %v1205 = vrot.slane %v1204, 2
        %v1206 = vadd.f32 %v1204, %v1205
        %v1207 = vrot.slane %v1206, 1
        %v1208 = vadd.f32 %v1206, %v1207
        %1209 = vrot.lane.b32.xlu0 %v312, 120
        %v1210 = vpop.permute.xlu0 %1209
        %1212 = vxpose.xlu0.b32.start [1/16] %v1210, 128
        %1213 = vxpose.xlu0.b32.cont [2/16] 0.0, 128
        %1214 = vxpose.xlu0.b32.cont [3/16] 0.0, 128
        %1215 = vxpose.xlu0.b32.cont [4/16] 0.0, 128
        %1216 = vxpose.xlu0.b32.cont [5/16] 0.0, 128
        %1217 = vxpose.xlu0.b32.cont [6/16] 0.0, 128
        %1218 = vxpose.xlu0.b32.cont [7/16] 0.0, 128
        %1219 = vxpose.xlu0.b32.cont [8/16] 0.0, 128
        %1220 = vxpose.xlu0.b32.cont [9/16] 0.0, 128
        %1221 = vxpose.xlu0.b32.cont [10/16] 0.0, 128
        %1222 = vxpose.xlu0.b32.cont [11/16] 0.0, 128
        %1223 = vxpose.xlu0.b32.cont [12/16] 0.0, 128
        %1224 = vxpose.xlu0.b32.cont [13/16] 0.0, 128
        %1225 = vxpose.xlu0.b32.cont [14/16] 0.0, 128
        %1226 = vxpose.xlu0.b32.cont [15/16] 0.0, 128
        %1227 = vxpose.xlu0.b32.end [16/16] 0.0, 128
        %v1228 = vpop.trf.xlu0
        %v1229 = vpop.trf.xlu0
        %v1230 = vpop.trf.xlu0
        %v1231 = vpop.trf.xlu0
        %v1232 = vpop.trf.xlu0
        %v1233 = vpop.trf.xlu0
        %v1234 = vpop.trf.xlu0
        %v1235 = vpop.trf.xlu0
        %v1236 = vpop.trf.xlu0
        %v1237 = vpop.trf.xlu0
        %v1238 = vpop.trf.xlu0
        %v1239 = vpop.trf.xlu0
        %v1240 = vpop.trf.xlu0
        %v1241 = vpop.trf.xlu0
        %v1242 = vpop.trf.xlu0
        %v1243 = vpop.trf.xlu0
        %v1245 = vsel %vm319, %v1228, 0
        %1247 = vmatprep.subr.mxu0 0.0
        %1248 = vmatpush1.msra.mxu0 %v958
        %1249 = vmatprep.subr.mxu0 0.0
        %1250 = vmatpush1.msra.mxu0 0.0
        %1251 = vmatprep.subr.mxu0 0.0
        %1252 = vmatpush1.msra.mxu0 0.0
        %1253 = vmatprep.subr.mxu0 0.0
        %1254 = vmatpush1.msra.mxu0 0.0
        %1255 = vmatprep.subr.mxu0 0.0
        %1256 = vmatpush1.msra.mxu0 0.0
        %1257 = vmatprep.subr.mxu0 0.0
        %1258 = vmatpush1.msra.mxu0 0.0
        %1259 = vmatprep.subr.mxu0 0.0
        %1260 = vmatpush1.msra.mxu0 0.0
        %1261 = vmatprep.subr.mxu0 0.0
        %1262 = vmatpush1.msra.mxu0 0.0
        %1263 = vmatprep.subr.mxu0 0.0
        %1264 = vmatpush1.msra.mxu0 0.0
        %1265 = vmatprep.subr.mxu0 0.0
        %1266 = vmatpush1.msra.mxu0 0.0
        %1267 = vmatprep.subr.mxu0 0.0
        %1268 = vmatpush1.msra.mxu0 0.0
        %1269 = vmatprep.subr.mxu0 0.0
        %1270 = vmatpush1.msra.mxu0 0.0
        %1271 = vmatprep.subr.mxu0 0.0
        %1272 = vmatpush1.msra.mxu0 0.0
        %1273 = vmatprep.subr.mxu0 0.0
        %1274 = vmatpush1.msra.mxu0 0.0
        %1275 = vmatprep.subr.mxu0 0.0
        %1276 = vmatpush1.msra.mxu0 0.0
        %1277 = vmatprep.subr.mxu0 0.0
        %1278 = vmatpush1.msra.mxu0 0.0
        %1279 = vmatprep.subr.mxu0 0.0
        %1280 = vmatpush1.msra.mxu0 0.0
        %1281 = vmatprep.subr.mxu0 0.0
        %1282 = vmatpush1.msra.mxu0 0.0
        %1283 = vmatprep.subr.mxu0 0.0
        %1284 = vmatpush1.msra.mxu0 0.0
        %1285 = vmatprep.subr.mxu0 0.0
        %1286 = vmatpush1.msra.mxu0 0.0
        %1287 = vmatprep.subr.mxu0 0.0
        %1288 = vmatpush1.msra.mxu0 0.0
        %1289 = vmatprep.subr.mxu0 0.0
        %1290 = vmatpush1.msra.mxu0 0.0
        %1291 = vmatprep.subr.mxu0 0.0
        %1292 = vmatpush1.msra.mxu0 0.0
        %1293 = vmatprep.subr.mxu0 0.0
        %1294 = vmatpush1.msra.mxu0 0.0
        %1295 = vmatprep.subr.mxu0 0.0
        %1296 = vmatpush1.msra.mxu0 0.0
        %1297 = vmatprep.subr.mxu0 0.0
        %1298 = vmatpush1.msra.mxu0 0.0
        %1299 = vmatprep.subr.mxu0 0.0
        %1300 = vmatpush1.msra.mxu0 0.0
        %1301 = vmatprep.subr.mxu0 0.0
        %1302 = vmatpush1.msra.mxu0 0.0
        %1303 = vmatprep.subr.mxu0 0.0
        %1304 = vmatpush1.msra.mxu0 0.0
        %1305 = vmatprep.subr.mxu0 0.0
        %1306 = vmatpush1.msra.mxu0 0.0
        %1307 = vmatprep.subr.mxu0 0.0
        %1308 = vmatpush1.msra.mxu0 0.0
        %1309 = vmatprep.subr.mxu0 0.0
        %1310 = vmatpush1.msra.mxu0 0.0
        %1311 = vmatprep.mubr.f32.mxu0 0.0
        %1312 = vmatmul.mubr.f32.gmra.mrb[0].mxu0 %v1245
        %v1313 = vpop.f32.mrb[0].mxu0
        %v1314 = vadd.f32 0.0, %v1313
        %v1315 = vpop.f32.mrb[0].mxu0
        %1316 = vdwg.mxu0
        %1317 = vxpose.xlu0.b32.start [1/16] %v1201, 128
        %1318 = vxpose.xlu0.b32.cont [2/16] 0.0, 128
        %1319 = vxpose.xlu0.b32.cont [3/16] 0.0, 128
        %1320 = vxpose.xlu0.b32.cont [4/16] 0.0, 128
        %1321 = vxpose.xlu0.b32.cont [5/16] 0.0, 128
        %1322 = vxpose.xlu0.b32.cont [6/16] 0.0, 128
        %1323 = vxpose.xlu0.b32.cont [7/16] 0.0, 128
        %1324 = vxpose.xlu0.b32.cont [8/16] 0.0, 128
        %1325 = vxpose.xlu0.b32.cont [9/16] 0.0, 128
        %1326 = vxpose.xlu0.b32.cont [10/16] 0.0, 128
        %1327 = vxpose.xlu0.b32.cont [11/16] 0.0, 128
        %1328 = vxpose.xlu0.b32.cont [12/16] 0.0, 128
        %1329 = vxpose.xlu0.b32.cont [13/16] 0.0, 128
        %1330 = vxpose.xlu0.b32.cont [14/16] 0.0, 128
        %1331 = vxpose.xlu0.b32.cont [15/16] 0.0, 128
        %1332 = vxpose.xlu0.b32.end [16/16] 0.0, 128
        %v1333 = vpop.trf.xlu0
        %v1334 = vpop.trf.xlu0
        %v1335 = vpop.trf.xlu0
        %v1336 = vpop.trf.xlu0
        %v1337 = vpop.trf.xlu0
        %v1338 = vpop.trf.xlu0
        %v1339 = vpop.trf.xlu0
        %v1340 = vpop.trf.xlu0
        %v1341 = vpop.trf.xlu0
        %v1342 = vpop.trf.xlu0
        %v1343 = vpop.trf.xlu0
        %v1344 = vpop.trf.xlu0
        %v1345 = vpop.trf.xlu0
        %v1346 = vpop.trf.xlu0
        %v1347 = vpop.trf.xlu0
        %v1348 = vpop.trf.xlu0
        %v1350 = vsel %vm319, %v1333, 0
        %v1353 = vsel %vm319, %v1334, 0
        %v1356 = vsel %vm319, %v1335, 0
        %v1359 = vsel %vm319, %v1336, 0
        %v1362 = vsel %vm319, %v1337, 0
        %v1365 = vsel %vm319, %v1338, 0
        %v1368 = vsel %vm319, %v1339, 0
        %v1371 = vsel %vm319, %v1340, 0
        %1373 = vmatprep.subr.mxu0 0.0
        %1374 = vmatpush1.msra.mxu0 %v958
        %1375 = vmatprep.subr.mxu0 0.0
        %1376 = vmatpush1.msra.mxu0 0.0
        %1377 = vmatprep.subr.mxu0 0.0
        %1378 = vmatpush1.msra.mxu0 0.0
        %1379 = vmatprep.subr.mxu0 0.0
        %1380 = vmatpush1.msra.mxu0 0.0
        %1381 = vmatprep.subr.mxu0 0.0
        %1382 = vmatpush1.msra.mxu0 0.0
        %1383 = vmatprep.subr.mxu0 0.0
        %1384 = vmatpush1.msra.mxu0 0.0
        %1385 = vmatprep.subr.mxu0 0.0
        %1386 = vmatpush1.msra.mxu0 0.0
        %1387 = vmatprep.subr.mxu0 0.0
        %1388 = vmatpush1.msra.mxu0 0.0
        %1389 = vmatprep.subr.mxu0 0.0
        %1390 = vmatpush1.msra.mxu0 0.0
        %1391 = vmatprep.subr.mxu0 0.0
        %1392 = vmatpush1.msra.mxu0 0.0
        %1393 = vmatprep.subr.mxu0 0.0
        %1394 = vmatpush1.msra.mxu0 0.0
        %1395 = vmatprep.subr.mxu0 0.0
        %1396 = vmatpush1.msra.mxu0 0.0
        %1397 = vmatprep.subr.mxu0 0.0
        %1398 = vmatpush1.msra.mxu0 0.0
        %1399 = vmatprep.subr.mxu0 0.0
        %1400 = vmatpush1.msra.mxu0 0.0
        %1401 = vmatprep.subr.mxu0 0.0
        %1402 = vmatpush1.msra.mxu0 0.0
        %1403 = vmatprep.subr.mxu0 0.0
        %1404 = vmatpush1.msra.mxu0 0.0
        %1405 = vmatprep.subr.mxu0 0.0
        %1406 = vmatpush1.msra.mxu0 0.0
        %1407 = vmatprep.subr.mxu0 0.0
        %1408 = vmatpush1.msra.mxu0 0.0
        %1409 = vmatprep.subr.mxu0 0.0
        %1410 = vmatpush1.msra.mxu0 0.0
        %1411 = vmatprep.subr.mxu0 0.0
        %1412 = vmatpush1.msra.mxu0 0.0
        %1413 = vmatprep.subr.mxu0 0.0
        %1414 = vmatpush1.msra.mxu0 0.0
        %1415 = vmatprep.subr.mxu0 0.0
        %1416 = vmatpush1.msra.mxu0 0.0
        %1417 = vmatprep.subr.mxu0 0.0
        %1418 = vmatpush1.msra.mxu0 0.0
        %1419 = vmatprep.subr.mxu0 0.0
        %1420 = vmatpush1.msra.mxu0 0.0
        %1421 = vmatprep.subr.mxu0 0.0
        %1422 = vmatpush1.msra.mxu0 0.0
        %1423 = vmatprep.subr.mxu0 0.0
        %1424 = vmatpush1.msra.mxu0 0.0
        %1425 = vmatprep.subr.mxu0 0.0
        %1426 = vmatpush1.msra.mxu0 0.0
        %1427 = vmatprep.subr.mxu0 0.0
        %1428 = vmatpush1.msra.mxu0 0.0
        %1429 = vmatprep.subr.mxu0 0.0
        %1430 = vmatpush1.msra.mxu0 0.0
        %1431 = vmatprep.subr.mxu0 0.0
        %1432 = vmatpush1.msra.mxu0 0.0
        %1433 = vmatprep.subr.mxu0 0.0
        %1434 = vmatpush1.msra.mxu0 0.0
        %1435 = vmatprep.subr.mxu0 0.0
        %1436 = vmatpush1.msra.mxu0 0.0
        %1437 = vmatprep.mubr.f32.mxu0 0.0
        %1438 = vmatmul.mubr.f32.gmra.mrb[0].mxu0 %v1350
        %v1439 = vpop.f32.mrb[0].mxu0
        %v1440 = vadd.f32 0.0, %v1439
        %v1441 = vpop.f32.mrb[0].mxu0
        %1442 = vmatprep.mubr.f32.mxu0 0.0
        %1443 = vmatmul.mubr.f32.gmra.mrb[0].mxu0 %v1353
        %v1444 = vpop.f32.mrb[0].mxu0
        %v1445 = vadd.f32 0.0, %v1444
        %v1446 = vpop.f32.mrb[0].mxu0
        %1447 = vmatprep.mubr.f32.mxu0 0.0
        %1448 = vmatmul.mubr.f32.gmra.mrb[0].mxu0 %v1356
        %v1449 = vpop.f32.mrb[0].mxu0
        %v1450 = vadd.f32 0.0, %v1449
        %v1451 = vpop.f32.mrb[0].mxu0
        %1452 = vmatprep.mubr.f32.mxu0 0.0
        %1453 = vmatmul.mubr.f32.gmra.mrb[0].mxu0 %v1359
        %v1454 = vpop.f32.mrb[0].mxu0
        %v1455 = vadd.f32 0.0, %v1454
        %v1456 = vpop.f32.mrb[0].mxu0
        %1457 = vmatprep.mubr.f32.mxu0 0.0
        %1458 = vmatmul.mubr.f32.gmra.mrb[0].mxu0 %v1362
        %v1459 = vpop.f32.mrb[0].mxu0
        %v1460 = vadd.f32 0.0, %v1459
        %v1461 = vpop.f32.mrb[0].mxu0
        %1462 = vmatprep.mubr.f32.mxu0 0.0
        %1463 = vmatmul.mubr.f32.gmra.mrb[0].mxu0 %v1365
        %v1464 = vpop.f32.mrb[0].mxu0
        %v1465 = vadd.f32 0.0, %v1464
        %v1466 = vpop.f32.mrb[0].mxu0
        %1467 = vmatprep.mubr.f32.mxu0 0.0
        %1468 = vmatmul.mubr.f32.gmra.mrb[0].mxu0 %v1368
        %v1469 = vpop.f32.mrb[0].mxu0
        %v1470 = vadd.f32 0.0, %v1469
        %v1471 = vpop.f32.mrb[0].mxu0
        %1472 = vmatprep.mubr.f32.mxu0 0.0
        %1473 = vmatmul.mubr.f32.gmra.mrb[0].mxu0 %v1371
        %v1474 = vpop.f32.mrb[0].mxu0
        %v1475 = vadd.f32 0.0, %v1474
        %v1476 = vpop.f32.mrb[0].mxu0
        %1477 = vdwg.mxu0
        %s1478 = scalar_lea.vmem %s190, 80
        %v1479 = vld [vmem:[%s1478] sm:$0x1]
        %v1480 = vadd.f32 %v1479, %v1208
        %1481 = vst.msk [vmem:[%s1478] sm:$0x1] %vm926, %v1480
        %v1482 = vld [vmem:[%s1478 + $0x8] sm:$0xff]
        %v1483 = vadd.f32 %v1482, %v1314
        %1484 = vst.msk [vmem:[%s1478 + $0x8] sm:$0xff] %vm650, %v1483
        %v1485 = vld [vmem:[%s1478 + $0x10] sm:$0xff]
        %v1486 = vld [vmem:[%s1478 + $0x18] sm:$0xff]
        %v1487 = vld [vmem:[%s1478 + $0x20] sm:$0xff]
        %v1488 = vld [vmem:[%s1478 + $0x28] sm:$0xff]
        %v1489 = vld [vmem:[%s1478 + $0x30] sm:$0xff]
        %v1490 = vld [vmem:[%s1478 + $0x38] sm:$0xff]
        %v1491 = vld [vmem:[%s1478 + $0x40] sm:$0xff]
        %v1492 = vld [vmem:[%s1478 + $0x48] sm:$0xff]
        %v1493 = vadd.f32 %v1485, %v1440
        %v1494 = vadd.f32 %v1486, %v1445
        %v1495 = vadd.f32 %v1487, %v1450
        %v1496 = vadd.f32 %v1488, %v1455
        %v1497 = vadd.f32 %v1489, %v1460
        %v1498 = vadd.f32 %v1490, %v1465
        %v1499 = vadd.f32 %v1491, %v1470
        %v1500 = vadd.f32 %v1492, %v1475
        %1501 = vst.msk [vmem:[%s1478 + $0x10] sm:$0xff] %vm650, %v1493
        %1502 = vst.msk [vmem:[%s1478 + $0x18] sm:$0xff] %vm650, %v1494
        %1503 = vst.msk [vmem:[%s1478 + $0x20] sm:$0xff] %vm650, %v1495
        %1504 = vst.msk [vmem:[%s1478 + $0x28] sm:$0xff] %vm650, %v1496
        %1505 = vst.msk [vmem:[%s1478 + $0x30] sm:$0xff] %vm650, %v1497
        %1506 = vst.msk [vmem:[%s1478 + $0x38] sm:$0xff] %vm650, %v1498
        %1507 = vst.msk [vmem:[%s1478 + $0x40] sm:$0xff] %vm650, %v1499
        %1508 = vst.msk [vmem:[%s1478 + $0x48] sm:$0xff] %vm650, %v1500
        %1509 = vrot.lane.b32.xlu0 %v312, 80
        %v1510 = vpop.permute.xlu0 %1509
        %v1512 = vsel %vm319, %v1510, 1.0
        %s1514 = sor.u32 256, 16
        %1515 = vbcast.lane.b32.xlu0 %v324, %s1514
        %v1516 = vpop.permute.xlu0 %1515
        %s1518 = sor.u32 256, 16
        %1519 = vbcast.lane.b32.xlu0 %v331, %s1518
        %v1520 = vpop.permute.xlu0 %1519
        %s1522 = sor.u32 256, 16
        %1523 = vbcast.lane.b32.xlu0 %v338, %s1522
        %v1524 = vpop.permute.xlu0 %1523
        %s1526 = sor.u32 256, 16
        %1527 = vbcast.lane.b32.xlu0 %v345, %s1526
        %v1528 = vpop.permute.xlu0 %1527
        %s1530 = sor.u32 256, 16
        %1531 = vbcast.lane.b32.xlu0 %v352, %s1530
        %v1532 = vpop.permute.xlu0 %1531
        %s1534 = sor.u32 256, 16
        %1535 = vbcast.lane.b32.xlu0 %v359, %s1534
        %v1536 = vpop.permute.xlu0 %1535
        %s1538 = sor.u32 256, 16
        %1539 = vbcast.lane.b32.xlu0 %v366, %s1538
        %v1540 = vpop.permute.xlu0 %1539
        %s1542 = sor.u32 256, 16
        %1543 = vbcast.lane.b32.xlu0 %v373, %s1542
        %v1544 = vpop.permute.xlu0 %1543
        %v1545 = vmul.f32 %v1516, %v429
        %v1546 = vmul.f32 %v1520, %v433
        %v1547 = vmul.f32 %v1524, %v437
        %v1548 = vmul.f32 %v1528, %v441
        %v1549 = vmul.f32 %v1532, %v445
        %v1550 = vmul.f32 %v1536, %v449
        %v1551 = vmul.f32 %v1540, %v453
        %v1552 = vmul.f32 %v1544, %v457
        %1561 = vrot.lane.b32.xlu0 %v1545, 112
        %v1562 = vpop.permute.xlu0 %1561
        %1563 = vrot.lane.b32.xlu0 %v1546, 112
        %v1564 = vpop.permute.xlu0 %1563
        %1565 = vrot.lane.b32.xlu0 %v1547, 112
        %v1566 = vpop.permute.xlu0 %1565
        %1567 = vrot.lane.b32.xlu0 %v1548, 112
        %v1568 = vpop.permute.xlu0 %1567
        %1569 = vrot.lane.b32.xlu0 %v1549, 112
        %v1570 = vpop.permute.xlu0 %1569
        %1571 = vrot.lane.b32.xlu0 %v1550, 112
        %v1572 = vpop.permute.xlu0 %1571
        %1573 = vrot.lane.b32.xlu0 %v1551, 112
        %v1574 = vpop.permute.xlu0 %1573
        %1575 = vrot.lane.b32.xlu0 %v1552, 112
        %v1576 = vpop.permute.xlu0 %1575
        %v1585 = vcombine.low %v1562, %v1566
        %v1586 = vcombine.high %v1562, %v1566
        %v1588 = vunpack.c.l.s4 1983009808
        %v1589 = vunpack.c.0.s8 %v1588
        %v1590 = vlaneseq
        %v1591 = vshrl.u32 %v1590, 7
        %v1592 = vsub.s32 %v1589, %v1591
        %v1593 = vrot.slane %v1585, %v1592
        %v1595 = vunpack.c.l.s4 1983009808
        %v1596 = vunpack.c.0.s8 %v1595
        %v1597 = vlaneseq
        %v1598 = vshrl.u32 %v1597, 7
        %v1599 = vsub.s32 %v1596, %v1598
        %v1600 = vrot.slane %v1586, %v1599
        %v1601 = vcombine.low %v1564, %v1568
        %v1602 = vcombine.high %v1564, %v1568
        %v1604 = vunpack.c.l.s4 1983009808
        %v1605 = vunpack.c.0.s8 %v1604
        %v1606 = vlaneseq
        %v1607 = vshrl.u32 %v1606, 7
        %v1608 = vsub.s32 %v1605, %v1607
        %v1609 = vrot.slane %v1601, %v1608
        %v1611 = vunpack.c.l.s4 1983009808
        %v1612 = vunpack.c.0.s8 %v1611
        %v1613 = vlaneseq
        %v1614 = vshrl.u32 %v1613, 7
        %v1615 = vsub.s32 %v1612, %v1614
        %v1616 = vrot.slane %v1602, %v1615
        %v1617 = vcombine.low %v1570, %v1574
        %v1618 = vcombine.high %v1570, %v1574
        %v1620 = vunpack.c.l.s4 1983009808
        %v1621 = vunpack.c.0.s8 %v1620
        %v1622 = vlaneseq
        %v1623 = vshrl.u32 %v1622, 7
        %v1624 = vsub.s32 %v1621, %v1623
        %v1625 = vrot.slane %v1617, %v1624
        %v1627 = vunpack.c.l.s4 1983009808
        %v1628 = vunpack.c.0.s8 %v1627
        %v1629 = vlaneseq
        %v1630 = vshrl.u32 %v1629, 7
        %v1631 = vsub.s32 %v1628, %v1630
        %v1632 = vrot.slane %v1618, %v1631
        %v1633 = vcombine.low %v1572, %v1576
        %v1634 = vcombine.high %v1572, %v1576
        %v1636 = vunpack.c.l.s4 1983009808
        %v1637 = vunpack.c.0.s8 %v1636
        %v1638 = vlaneseq
        %v1639 = vshrl.u32 %v1638, 7
        %v1640 = vsub.s32 %v1637, %v1639
        %v1641 = vrot.slane %v1633, %v1640
        %v1643 = vunpack.c.l.s4 1983009808
        %v1644 = vunpack.c.0.s8 %v1643
        %v1645 = vlaneseq
        %v1646 = vshrl.u32 %v1645, 7
        %v1647 = vsub.s32 %v1644, %v1646
        %v1648 = vrot.slane %v1634, %v1647
        %v1649 = vcombine.low %v1593, %v1609
        %v1650 = vcombine.high %v1593, %v1609
        %v1652 = vunpack.c.l.s4 1934713408
        %v1653 = vunpack.c.0.s8 %v1652
        %v1654 = vlaneseq
        %v1655 = vshrl.u32 %v1654, 7
        %v1656 = vsub.s32 %v1653, %v1655
        %v1657 = vrot.slane %v1649, %v1656
        %v1659 = vunpack.c.l.s4 1934713408
        %v1660 = vunpack.c.0.s8 %v1659
        %v1661 = vlaneseq
        %v1662 = vshrl.u32 %v1661, 7
        %v1663 = vsub.s32 %v1660, %v1662
        %v1664 = vrot.slane %v1650, %v1663
        %v1665 = vcombine.low %v1600, %v1616
        %v1666 = vcombine.high %v1600, %v1616
        %v1668 = vunpack.c.l.s4 1934713408
        %v1669 = vunpack.c.0.s8 %v1668
        %v1670 = vlaneseq
        %v1671 = vshrl.u32 %v1670, 7
        %v1672 = vsub.s32 %v1669, %v1671
        %v1673 = vrot.slane %v1665, %v1672
        %v1675 = vunpack.c.l.s4 1934713408
        %v1676 = vunpack.c.0.s8 %v1675
        %v1677 = vlaneseq
        %v1678 = vshrl.u32 %v1677, 7
        %v1679 = vsub.s32 %v1676, %v1678
        %v1680 = vrot.slane %v1666, %v1679
        %v1681 = vcombine.low %v1625, %v1641
        %v1682 = vcombine.high %v1625, %v1641
        %v1684 = vunpack.c.l.s4 1934713408
        %v1685 = vunpack.c.0.s8 %v1684
        %v1686 = vlaneseq
        %v1687 = vshrl.u32 %v1686, 7
        %v1688 = vsub.s32 %v1685, %v1687
        %v1689 = vrot.slane %v1681, %v1688
        %v1691 = vunpack.c.l.s4 1934713408
        %v1692 = vunpack.c.0.s8 %v1691
        %v1693 = vlaneseq
        %v1694 = vshrl.u32 %v1693, 7
        %v1695 = vsub.s32 %v1692, %v1694
        %v1696 = vrot.slane %v1682, %v1695
        %v1697 = vcombine.low %v1632, %v1648
        %v1698 = vcombine.high %v1632, %v1648
        %v1700 = vunpack.c.l.s4 1934713408
        %v1701 = vunpack.c.0.s8 %v1700
        %v1702 = vlaneseq
        %v1703 = vshrl.u32 %v1702, 7
        %v1704 = vsub.s32 %v1701, %v1703
        %v1705 = vrot.slane %v1697, %v1704
        %v1707 = vunpack.c.l.s4 1934713408
        %v1708 = vunpack.c.0.s8 %v1707
        %v1709 = vlaneseq
        %v1710 = vshrl.u32 %v1709, 7
        %v1711 = vsub.s32 %v1708, %v1710
        %v1712 = vrot.slane %v1698, %v1711
        %v1713 = vcombine.low %v1657, %v1689
        %v1714 = vcombine.high %v1657, %v1689
        %v1715 = vcombine.low %v1664, %v1696
        %v1716 = vcombine.high %v1664, %v1696
        %v1717 = vcombine.low %v1673, %v1705
        %v1718 = vcombine.high %v1673, %v1705
        %v1719 = vcombine.low %v1680, %v1712
        %v1720 = vcombine.high %v1680, %v1712
        %1722 = vrot.lane.b32.xlu0 %v1714, 8
        %v1723 = vpop.permute.xlu0 %1722
        %1726 = vrot.lane.b32.xlu0 %v1715, 16
        %v1727 = vpop.permute.xlu0 %1726
        %1730 = vrot.lane.b32.xlu0 %v1716, 24
        %v1731 = vpop.permute.xlu0 %1730
        %1734 = vrot.lane.b32.xlu0 %v1717, 32
        %v1735 = vpop.permute.xlu0 %1734
        %1738 = vrot.lane.b32.xlu0 %v1718, 40
        %v1739 = vpop.permute.xlu0 %1738
        %1742 = vrot.lane.b32.xlu0 %v1719, 48
        %v1743 = vpop.permute.xlu0 %1742
        %1746 = vrot.lane.b32.xlu0 %v1720, 56
        %v1747 = vpop.permute.xlu0 %1746
        %v1749 = vsel %vm319, %v1713, %v1723
        %v1750 = vsel %vm639, %v1749, %v1727
        %v1751 = vsel %vm641, %v1750, %v1731
        %v1752 = vsel %vm241, %v1751, %v1735
        %v1753 = vsel %vm644, %v1752, %v1739
        %v1754 = vsel %vm646, %v1753, %v1743
        %v1755 = vsel %vm648, %v1754, %v1747
        %v1756 = vsel %vm650, %v1512, 0.0
        %v1757 = vrot.slane %v1756, 4
        %v1758 = vadd.f32 %v1756, %v1757
        %v1759 = vrot.slane %v1758, 2
        %v1760 = vadd.f32 %v1758, %v1759
        %v1761 = vrot.slane %v1760, 1
        %v1762 = vadd.f32 %v1760, %v1761
        %1763 = vrot.lane.b32.xlu0 %v312, 112
        %v1764 = vpop.permute.xlu0 %1763
        %1766 = vxpose.xlu0.b32.start [1/16] %v1764, 128
        %1767 = vxpose.xlu0.b32.cont [2/16] 0.0, 128
        %1768 = vxpose.xlu0.b32.cont [3/16] 0.0, 128
        %1769 = vxpose.xlu0.b32.cont [4/16] 0.0, 128
        %1770 = vxpose.xlu0.b32.cont [5/16] 0.0, 128
        %1771 = vxpose.xlu0.b32.cont [6/16] 0.0, 128
        %1772 = vxpose.xlu0.b32.cont [7/16] 0.0, 128
        %1773 = vxpose.xlu0.b32.cont [8/16] 0.0, 128
        %1774 = vxpose.xlu0.b32.cont [9/16] 0.0, 128
        %1775 = vxpose.xlu0.b32.cont [10/16] 0.0, 128
        %1776 = vxpose.xlu0.b32.cont [11/16] 0.0, 128
        %1777 = vxpose.xlu0.b32.cont [12/16] 0.0, 128
        %1778 = vxpose.xlu0.b32.cont [13/16] 0.0, 128
        %1779 = vxpose.xlu0.b32.cont [14/16] 0.0, 128
        %1780 = vxpose.xlu0.b32.cont [15/16] 0.0, 128
        %1781 = vxpose.xlu0.b32.end [16/16] 0.0, 128
        %v1782 = vpop.trf.xlu0
        %v1783 = vpop.trf.xlu0
        %v1784 = vpop.trf.xlu0
        %v1785 = vpop.trf.xlu0
        %v1786 = vpop.trf.xlu0
        %v1787 = vpop.trf.xlu0
        %v1788 = vpop.trf.xlu0
        %v1789 = vpop.trf.xlu0
        %v1790 = vpop.trf.xlu0
        %v1791 = vpop.trf.xlu0
        %v1792 = vpop.trf.xlu0
        %v1793 = vpop.trf.xlu0
        %v1794 = vpop.trf.xlu0
        %v1795 = vpop.trf.xlu0
        %v1796 = vpop.trf.xlu0
        %v1797 = vpop.trf.xlu0
        %v1799 = vsel %vm319, %v1782, 0
        %1801 = vmatprep.subr.mxu0 0.0
        %1802 = vmatpush1.msra.mxu0 %v1512
        %1803 = vmatprep.subr.mxu0 0.0
        %1804 = vmatpush1.msra.mxu0 0.0
        %1805 = vmatprep.subr.mxu0 0.0
        %1806 = vmatpush1.msra.mxu0 0.0
        %1807 = vmatprep.subr.mxu0 0.0
        %1808 = vmatpush1.msra.mxu0 0.0
        %1809 = vmatprep.subr.mxu0 0.0
        %1810 = vmatpush1.msra.mxu0 0.0
        %1811 = vmatprep.subr.mxu0 0.0
        %1812 = vmatpush1.msra.mxu0 0.0
        %1813 = vmatprep.subr.mxu0 0.0
        %1814 = vmatpush1.msra.mxu0 0.0
        %1815 = vmatprep.subr.mxu0 0.0
        %1816 = vmatpush1.msra.mxu0 0.0
        %1817 = vmatprep.subr.mxu0 0.0
        %1818 = vmatpush1.msra.mxu0 0.0
        %1819 = vmatprep.subr.mxu0 0.0
        %1820 = vmatpush1.msra.mxu0 0.0
        %1821 = vmatprep.subr.mxu0 0.0
        %1822 = vmatpush1.msra.mxu0 0.0
        %1823 = vmatprep.subr.mxu0 0.0
        %1824 = vmatpush1.msra.mxu0 0.0
        %1825 = vmatprep.subr.mxu0 0.0
        %1826 = vmatpush1.msra.mxu0 0.0
        %1827 = vmatprep.subr.mxu0 0.0
        %1828 = vmatpush1.msra.mxu0 0.0
        %1829 = vmatprep.subr.mxu0 0.0
        %1830 = vmatpush1.msra.mxu0 0.0
        %1831 = vmatprep.subr.mxu0 0.0
        %1832 = vmatpush1.msra.mxu0 0.0
        %1833 = vmatprep.subr.mxu0 0.0
        %1834 = vmatpush1.msra.mxu0 0.0
        %1835 = vmatprep.subr.mxu0 0.0
        %1836 = vmatpush1.msra.mxu0 0.0
        %1837 = vmatprep.subr.mxu0 0.0
        %1838 = vmatpush1.msra.mxu0 0.0
        %1839 = vmatprep.subr.mxu0 0.0
        %1840 = vmatpush1.msra.mxu0 0.0
        %1841 = vmatprep.subr.mxu0 0.0
        %1842 = vmatpush1.msra.mxu0 0.0
        %1843 = vmatprep.subr.mxu0 0.0
        %1844 = vmatpush1.msra.mxu0 0.0
        %1845 = vmatprep.subr.mxu0 0.0
        %1846 = vmatpush1.msra.mxu0 0.0
        %1847 = vmatprep.subr.mxu0 0.0
        %1848 = vmatpush1.msra.mxu0 0.0
        %1849 = vmatprep.subr.mxu0 0.0
        %1850 = vmatpush1.msra.mxu0 0.0
        %1851 = vmatprep.subr.mxu0 0.0
        %1852 = vmatpush1.msra.mxu0 0.0
        %1853 = vmatprep.subr.mxu0 0.0
        %1854 = vmatpush1.msra.mxu0 0.0
        %1855 = vmatprep.subr.mxu0 0.0
        %1856 = vmatpush1.msra.mxu0 0.0
        %1857 = vmatprep.subr.mxu0 0.0
        %1858 = vmatpush1.msra.mxu0 0.0
        %1859 = vmatprep.subr.mxu0 0.0
        %1860 = vmatpush1.msra.mxu0 0.0
        %1861 = vmatprep.subr.mxu0 0.0
        %1862 = vmatpush1.msra.mxu0 0.0
        %1863 = vmatprep.subr.mxu0 0.0
        %1864 = vmatpush1.msra.mxu0 0.0
        %1865 = vmatprep.mubr.f32.mxu0 0.0
        %1866 = vmatmul.mubr.f32.gmra.mrb[0].mxu0 %v1799
        %v1867 = vpop.f32.mrb[0].mxu0
        %v1868 = vadd.f32 0.0, %v1867
        %v1869 = vpop.f32.mrb[0].mxu0
        %1870 = vdwg.mxu0
        %1871 = vxpose.xlu0.b32.start [1/16] %v1755, 128
        %1872 = vxpose.xlu0.b32.cont [2/16] 0.0, 128
        %1873 = vxpose.xlu0.b32.cont [3/16] 0.0, 128
        %1874 = vxpose.xlu0.b32.cont [4/16] 0.0, 128
        %1875 = vxpose.xlu0.b32.cont [5/16] 0.0, 128
        %1876 = vxpose.xlu0.b32.cont [6/16] 0.0, 128
        %1877 = vxpose.xlu0.b32.cont [7/16] 0.0, 128
        %1878 = vxpose.xlu0.b32.cont [8/16] 0.0, 128
        %1879 = vxpose.xlu0.b32.cont [9/16] 0.0, 128
        %1880 = vxpose.xlu0.b32.cont [10/16] 0.0, 128
        %1881 = vxpose.xlu0.b32.cont [11/16] 0.0, 128
        %1882 = vxpose.xlu0.b32.cont [12/16] 0.0, 128
        %1883 = vxpose.xlu0.b32.cont [13/16] 0.0, 128
        %1884 = vxpose.xlu0.b32.cont [14/16] 0.0, 128
        %1885 = vxpose.xlu0.b32.cont [15/16] 0.0, 128
        %1886 = vxpose.xlu0.b32.end [16/16] 0.0, 128
        %v1887 = vpop.trf.xlu0
        %v1888 = vpop.trf.xlu0
        %v1889 = vpop.trf.xlu0
        %v1890 = vpop.trf.xlu0
        %v1891 = vpop.trf.xlu0
        %v1892 = vpop.trf.xlu0
        %v1893 = vpop.trf.xlu0
        %v1894 = vpop.trf.xlu0
        %v1895 = vpop.trf.xlu0
        %v1896 = vpop.trf.xlu0
        %v1897 = vpop.trf.xlu0
        %v1898 = vpop.trf.xlu0
        %v1899 = vpop.trf.xlu0
        %v1900 = vpop.trf.xlu0
        %v1901 = vpop.trf.xlu0
        %v1902 = vpop.trf.xlu0
        %v1904 = vsel %vm319, %v1887, 0
        %v1907 = vsel %vm319, %v1888, 0
        %v1910 = vsel %vm319, %v1889, 0
        %v1913 = vsel %vm319, %v1890, 0
        %v1916 = vsel %vm319, %v1891, 0
        %v1919 = vsel %vm319, %v1892, 0
        %v1922 = vsel %vm319, %v1893, 0
        %v1925 = vsel %vm319, %v1894, 0
        %1927 = vmatprep.subr.mxu0 0.0
        %1928 = vmatpush1.msra.mxu0 %v1512
        %1929 = vmatprep.subr.mxu0 0.0
        %1930 = vmatpush1.msra.mxu0 0.0
        %1931 = vmatprep.subr.mxu0 0.0
        %1932 = vmatpush1.msra.mxu0 0.0
        %1933 = vmatprep.subr.mxu0 0.0
        %1934 = vmatpush1.msra.mxu0 0.0
        %1935 = vmatprep.subr.mxu0 0.0
        %1936 = vmatpush1.msra.mxu0 0.0
        %1937 = vmatprep.subr.mxu0 0.0
        %1938 = vmatpush1.msra.mxu0 0.0
        %1939 = vmatprep.subr.mxu0 0.0
        %1940 = vmatpush1.msra.mxu0 0.0
        %1941 = vmatprep.subr.mxu0 0.0
        %1942 = vmatpush1.msra.mxu0 0.0
        %1943 = vmatprep.subr.mxu0 0.0
        %1944 = vmatpush1.msra.mxu0 0.0
        %1945 = vmatprep.subr.mxu0 0.0
        %1946 = vmatpush1.msra.mxu0 0.0
        %1947 = vmatprep.subr.mxu0 0.0
        %1948 = vmatpush1.msra.mxu0 0.0
        %1949 = vmatprep.subr.mxu0 0.0
        %1950 = vmatpush1.msra.mxu0 0.0
        %1951 = vmatprep.subr.mxu0 0.0
        %1952 = vmatpush1.msra.mxu0 0.0
        %1953 = vmatprep.subr.mxu0 0.0
        %1954 = vmatpush1.msra.mxu0 0.0
        %1955 = vmatprep.subr.mxu0 0.0
        %1956 = vmatpush1.msra.mxu0 0.0
        %1957 = vmatprep.subr.mxu0 0.0
        %1958 = vmatpush1.msra.mxu0 0.0
        %1959 = vmatprep.subr.mxu0 0.0
        %1960 = vmatpush1.msra.mxu0 0.0
        %1961 = vmatprep.subr.mxu0 0.0
        %1962 = vmatpush1.msra.mxu0 0.0
        %1963 = vmatprep.subr.mxu0 0.0
        %1964 = vmatpush1.msra.mxu0 0.0
        %1965 = vmatprep.subr.mxu0 0.0
        %1966 = vmatpush1.msra.mxu0 0.0
        %1967 = vmatprep.subr.mxu0 0.0
        %1968 = vmatpush1.msra.mxu0 0.0
        %1969 = vmatprep.subr.mxu0 0.0
        %1970 = vmatpush1.msra.mxu0 0.0
        %1971 = vmatprep.subr.mxu0 0.0
        %1972 = vmatpush1.msra.mxu0 0.0
        %1973 = vmatprep.subr.mxu0 0.0
        %1974 = vmatpush1.msra.mxu0 0.0
        %1975 = vmatprep.subr.mxu0 0.0
        %1976 = vmatpush1.msra.mxu0 0.0
        %1977 = vmatprep.subr.mxu0 0.0
        %1978 = vmatpush1.msra.mxu0 0.0
        %1979 = vmatprep.subr.mxu0 0.0
        %1980 = vmatpush1.msra.mxu0 0.0
        %1981 = vmatprep.subr.mxu0 0.0
        %1982 = vmatpush1.msra.mxu0 0.0
        %1983 = vmatprep.subr.mxu0 0.0
        %1984 = vmatpush1.msra.mxu0 0.0
        %1985 = vmatprep.subr.mxu0 0.0
        %1986 = vmatpush1.msra.mxu0 0.0
        %1987 = vmatprep.subr.mxu0 0.0
        %1988 = vmatpush1.msra.mxu0 0.0
        %1989 = vmatprep.subr.mxu0 0.0
        %1990 = vmatpush1.msra.mxu0 0.0
        %1991 = vmatprep.mubr.f32.mxu0 0.0
        %1992 = vmatmul.mubr.f32.gmra.mrb[0].mxu0 %v1904
        %v1993 = vpop.f32.mrb[0].mxu0
        %v1994 = vadd.f32 0.0, %v1993
        %v1995 = vpop.f32.mrb[0].mxu0
        %1996 = vmatprep.mubr.f32.mxu0 0.0
        %1997 = vmatmul.mubr.f32.gmra.mrb[0].mxu0 %v1907
        %v1998 = vpop.f32.mrb[0].mxu0
        %v1999 = vadd.f32 0.0, %v1998
        %v2000 = vpop.f32.mrb[0].mxu0
        %2001 = vmatprep.mubr.f32.mxu0 0.0
        %2002 = vmatmul.mubr.f32.gmra.mrb[0].mxu0 %v1910
        %v2003 = vpop.f32.mrb[0].mxu0
        %v2004 = vadd.f32 0.0, %v2003
        %v2005 = vpop.f32.mrb[0].mxu0
        %2006 = vmatprep.mubr.f32.mxu0 0.0
        %2007 = vmatmul.mubr.f32.gmra.mrb[0].mxu0 %v1913
        %v2008 = vpop.f32.mrb[0].mxu0
        %v2009 = vadd.f32 0.0, %v2008
        %v2010 = vpop.f32.mrb[0].mxu0
        %2011 = vmatprep.mubr.f32.mxu0 0.0
        %2012 = vmatmul.mubr.f32.gmra.mrb[0].mxu0 %v1916
        %v2013 = vpop.f32.mrb[0].mxu0
        %v2014 = vadd.f32 0.0, %v2013
        %v2015 = vpop.f32.mrb[0].mxu0
        %2016 = vmatprep.mubr.f32.mxu0 0.0
        %2017 = vmatmul.mubr.f32.gmra.mrb[0].mxu0 %v1919
        %v2018 = vpop.f32.mrb[0].mxu0
        %v2019 = vadd.f32 0.0, %v2018
        %v2020 = vpop.f32.mrb[0].mxu0
        %2021 = vmatprep.mubr.f32.mxu0 0.0
        %2022 = vmatmul.mubr.f32.gmra.mrb[0].mxu0 %v1922
        %v2023 = vpop.f32.mrb[0].mxu0
        %v2024 = vadd.f32 0.0, %v2023
        %v2025 = vpop.f32.mrb[0].mxu0
        %2026 = vmatprep.mubr.f32.mxu0 0.0
        %2027 = vmatmul.mubr.f32.gmra.mrb[0].mxu0 %v1925
        %v2028 = vpop.f32.mrb[0].mxu0
        %v2029 = vadd.f32 0.0, %v2028
        %v2030 = vpop.f32.mrb[0].mxu0
        %2031 = vdwg.mxu0
        %s2032 = scalar_lea.vmem %s190, 160
        %v2033 = vld [vmem:[%s2032] sm:$0x1]
        %v2034 = vadd.f32 %v2033, %v1762
        %2035 = vst.msk [vmem:[%s2032] sm:$0x1] %vm926, %v2034
        %v2036 = vld [vmem:[%s2032 + $0x8] sm:$0xff]
        %v2037 = vadd.f32 %v2036, %v1868
        %2038 = vst.msk [vmem:[%s2032 + $0x8] sm:$0xff] %vm650, %v2037
        %v2039 = vld [vmem:[%s2032 + $0x10] sm:$0xff]
        %v2040 = vld [vmem:[%s2032 + $0x18] sm:$0xff]
        %v2041 = vld [vmem:[%s2032 + $0x20] sm:$0xff]
        %v2042 = vld [vmem:[%s2032 + $0x28] sm:$0xff]
        %v2043 = vld [vmem:[%s2032 + $0x30] sm:$0xff]
        %v2044 = vld [vmem:[%s2032 + $0x38] sm:$0xff]
        %v2045 = vld [vmem:[%s2032 + $0x40] sm:$0xff]
        %v2046 = vld [vmem:[%s2032 + $0x48] sm:$0xff]
        %v2047 = vadd.f32 %v2039, %v1994
        %v2048 = vadd.f32 %v2040, %v1999
        %v2049 = vadd.f32 %v2041, %v2004
        %v2050 = vadd.f32 %v2042, %v2009
        %v2051 = vadd.f32 %v2043, %v2014
        %v2052 = vadd.f32 %v2044, %v2019
        %v2053 = vadd.f32 %v2045, %v2024
        %v2054 = vadd.f32 %v2046, %v2029
        %2055 = vst.msk [vmem:[%s2032 + $0x10] sm:$0xff] %vm650, %v2047
        %2056 = vst.msk [vmem:[%s2032 + $0x18] sm:$0xff] %vm650, %v2048
        %2057 = vst.msk [vmem:[%s2032 + $0x20] sm:$0xff] %vm650, %v2049
        %2058 = vst.msk [vmem:[%s2032 + $0x28] sm:$0xff] %vm650, %v2050
        %2059 = vst.msk [vmem:[%s2032 + $0x30] sm:$0xff] %vm650, %v2051
        %2060 = vst.msk [vmem:[%s2032 + $0x38] sm:$0xff] %vm650, %v2052
        %2061 = vst.msk [vmem:[%s2032 + $0x40] sm:$0xff] %vm650, %v2053
        %2062 = vst.msk [vmem:[%s2032 + $0x48] sm:$0xff] %vm650, %v2054
        %2063 = vrot.lane.b32.xlu0 %v312, 72
        %v2064 = vpop.permute.xlu0 %2063
        %v2066 = vsel %vm319, %v2064, 1.0
        %s2068 = sor.u32 256, 24
        %2069 = vbcast.lane.b32.xlu0 %v324, %s2068
        %v2070 = vpop.permute.xlu0 %2069
        %s2072 = sor.u32 256, 24
        %2073 = vbcast.lane.b32.xlu0 %v331, %s2072
        %v2074 = vpop.permute.xlu0 %2073
        %s2076 = sor.u32 256, 24
        %2077 = vbcast.lane.b32.xlu0 %v338, %s2076
        %v2078 = vpop.permute.xlu0 %2077
        %s2080 = sor.u32 256, 24
        %2081 = vbcast.lane.b32.xlu0 %v345, %s2080
        %v2082 = vpop.permute.xlu0 %2081
        %s2084 = sor.u32 256, 24
        %2085 = vbcast.lane.b32.xlu0 %v352, %s2084
        %v2086 = vpop.permute.xlu0 %2085
        %s2088 = sor.u32 256, 24
        %2089 = vbcast.lane.b32.xlu0 %v359, %s2088
        %v2090 = vpop.permute.xlu0 %2089
        %s2092 = sor.u32 256, 24
        %2093 = vbcast.lane.b32.xlu0 %v366, %s2092
        %v2094 = vpop.permute.xlu0 %2093
        %s2096 = sor.u32 256, 24
        %2097 = vbcast.lane.b32.xlu0 %v373, %s2096
        %v2098 = vpop.permute.xlu0 %2097
        %v2099 = vmul.f32 %v2070, %v429
        %v2100 = vmul.f32 %v2074, %v433
        %v2101 = vmul.f32 %v2078, %v437
        %v2102 = vmul.f32 %v2082, %v441
        %v2103 = vmul.f32 %v2086, %v445
        %v2104 = vmul.f32 %v2090, %v449
        %v2105 = vmul.f32 %v2094, %v453
        %v2106 = vmul.f32 %v2098, %v457
        %2115 = vrot.lane.b32.xlu0 %v2099, 104
        %v2116 = vpop.permute.xlu0 %2115
        %2117 = vrot.lane.b32.xlu0 %v2100, 104
        %v2118 = vpop.permute.xlu0 %2117
        %2119 = vrot.lane.b32.xlu0 %v2101, 104
        %v2120 = vpop.permute.xlu0 %2119
        %2121 = vrot.lane.b32.xlu0 %v2102, 104
        %v2122 = vpop.permute.xlu0 %2121
        %2123 = vrot.lane.b32.xlu0 %v2103, 104
        %v2124 = vpop.permute.xlu0 %2123
        %2125 = vrot.lane.b32.xlu0 %v2104, 104
        %v2126 = vpop.permute.xlu0 %2125
        %2127 = vrot.lane.b32.xlu0 %v2105, 104
        %v2128 = vpop.permute.xlu0 %2127
        %2129 = vrot.lane.b32.xlu0 %v2106, 104
        %v2130 = vpop.permute.xlu0 %2129
        %v2139 = vcombine.low %v2116, %v2120
        %v2140 = vcombine.high %v2116, %v2120
        %v2142 = vunpack.c.l.s4 1983009808
        %v2143 = vunpack.c.0.s8 %v2142
        %v2144 = vlaneseq
        %v2145 = vshrl.u32 %v2144, 7
        %v2146 = vsub.s32 %v2143, %v2145
        %v2147 = vrot.slane %v2139, %v2146
        %v2149 = vunpack.c.l.s4 1983009808
        %v2150 = vunpack.c.0.s8 %v2149
        %v2151 = vlaneseq
        %v2152 = vshrl.u32 %v2151, 7
        %v2153 = vsub.s32 %v2150, %v2152
        %v2154 = vrot.slane %v2140, %v2153
        %v2155 = vcombine.low %v2118, %v2122
        %v2156 = vcombine.high %v2118, %v2122
        %v2158 = vunpack.c.l.s4 1983009808
        %v2159 = vunpack.c.0.s8 %v2158
        %v2160 = vlaneseq
        %v2161 = vshrl.u32 %v2160, 7
        %v2162 = vsub.s32 %v2159, %v2161
        %v2163 = vrot.slane %v2155, %v2162
        %v2165 = vunpack.c.l.s4 1983009808
        %v2166 = vunpack.c.0.s8 %v2165
        %v2167 = vlaneseq
        %v2168 = vshrl.u32 %v2167, 7
        %v2169 = vsub.s32 %v2166, %v2168
        %v2170 = vrot.slane %v2156, %v2169
        %v2171 = vcombine.low %v2124, %v2128
        %v2172 = vcombine.high %v2124, %v2128
        %v2174 = vunpack.c.l.s4 1983009808
        %v2175 = vunpack.c.0.s8 %v2174
        %v2176 = vlaneseq
        %v2177 = vshrl.u32 %v2176, 7
        %v2178 = vsub.s32 %v2175, %v2177
        %v2179 = vrot.slane %v2171, %v2178
        %v2181 = vunpack.c.l.s4 1983009808
        %v2182 = vunpack.c.0.s8 %v2181
        %v2183 = vlaneseq
        %v2184 = vshrl.u32 %v2183, 7
        %v2185 = vsub.s32 %v2182, %v2184
        %v2186 = vrot.slane %v2172, %v2185
        %v2187 = vcombine.low %v2126, %v2130
        %v2188 = vcombine.high %v2126, %v2130
        %v2190 = vunpack.c.l.s4 1983009808
        %v2191 = vunpack.c.0.s8 %v2190
        %v2192 = vlaneseq
        %v2193 = vshrl.u32 %v2192, 7
        %v2194 = vsub.s32 %v2191, %v2193
        %v2195 = vrot.slane %v2187, %v2194
        %v2197 = vunpack.c.l.s4 1983009808
        %v2198 = vunpack.c.0.s8 %v2197
        %v2199 = vlaneseq
        %v2200 = vshrl.u32 %v2199, 7
        %v2201 = vsub.s32 %v2198, %v2200
        %v2202 = vrot.slane %v2188, %v2201
        %v2203 = vcombine.low %v2147, %v2163
        %v2204 = vcombine.high %v2147, %v2163
        %v2206 = vunpack.c.l.s4 1934713408
        %v2207 = vunpack.c.0.s8 %v2206
        %v2208 = vlaneseq
        %v2209 = vshrl.u32 %v2208, 7
        %v2210 = vsub.s32 %v2207, %v2209
        %v2211 = vrot.slane %v2203, %v2210
        %v2213 = vunpack.c.l.s4 1934713408
        %v2214 = vunpack.c.0.s8 %v2213
        %v2215 = vlaneseq
        %v2216 = vshrl.u32 %v2215, 7
        %v2217 = vsub.s32 %v2214, %v2216
        %v2218 = vrot.slane %v2204, %v2217
        %v2219 = vcombine.low %v2154, %v2170
        %v2220 = vcombine.high %v2154, %v2170
        %v2222 = vunpack.c.l.s4 1934713408
        %v2223 = vunpack.c.0.s8 %v2222
        %v2224 = vlaneseq
        %v2225 = vshrl.u32 %v2224, 7
        %v2226 = vsub.s32 %v2223, %v2225
        %v2227 = vrot.slane %v2219, %v2226
        %v2229 = vunpack.c.l.s4 1934713408
        %v2230 = vunpack.c.0.s8 %v2229
        %v2231 = vlaneseq
        %v2232 = vshrl.u32 %v2231, 7
        %v2233 = vsub.s32 %v2230, %v2232
        %v2234 = vrot.slane %v2220, %v2233
        %v2235 = vcombine.low %v2179, %v2195
        %v2236 = vcombine.high %v2179, %v2195
        %v2238 = vunpack.c.l.s4 1934713408
        %v2239 = vunpack.c.0.s8 %v2238
        %v2240 = vlaneseq
        %v2241 = vshrl.u32 %v2240, 7
        %v2242 = vsub.s32 %v2239, %v2241
        %v2243 = vrot.slane %v2235, %v2242
        %v2245 = vunpack.c.l.s4 1934713408
        %v2246 = vunpack.c.0.s8 %v2245
        %v2247 = vlaneseq
        %v2248 = vshrl.u32 %v2247, 7
        %v2249 = vsub.s32 %v2246, %v2248
        %v2250 = vrot.slane %v2236, %v2249
        %v2251 = vcombine.low %v2186, %v2202
        %v2252 = vcombine.high %v2186, %v2202
        %v2254 = vunpack.c.l.s4 1934713408
        %v2255 = vunpack.c.0.s8 %v2254
        %v2256 = vlaneseq
        %v2257 = vshrl.u32 %v2256, 7
        %v2258 = vsub.s32 %v2255, %v2257
        %v2259 = vrot.slane %v2251, %v2258
        %v2261 = vunpack.c.l.s4 1934713408
        %v2262 = vunpack.c.0.s8 %v2261
        %v2263 = vlaneseq
        %v2264 = vshrl.u32 %v2263, 7
        %v2265 = vsub.s32 %v2262, %v2264
        %v2266 = vrot.slane %v2252, %v2265
        %v2267 = vcombine.low %v2211, %v2243
        %v2268 = vcombine.high %v2211, %v2243
        %v2269 = vcombine.low %v2218, %v2250
        %v2270 = vcombine.high %v2218, %v2250
        %v2271 = vcombine.low %v2227, %v2259
        %v2272 = vcombine.high %v2227, %v2259
        %v2273 = vcombine.low %v2234, %v2266
        %v2274 = vcombine.high %v2234, %v2266
        %2276 = vrot.lane.b32.xlu0 %v2268, 8
        %v2277 = vpop.permute.xlu0 %2276
        %2280 = vrot.lane.b32.xlu0 %v2269, 16
        %v2281 = vpop.permute.xlu0 %2280
        %2284 = vrot.lane.b32.xlu0 %v2270, 24
        %v2285 = vpop.permute.xlu0 %2284
        %2288 = vrot.lane.b32.xlu0 %v2271, 32
        %v2289 = vpop.permute.xlu0 %2288
        %2292 = vrot.lane.b32.xlu0 %v2272, 40
        %v2293 = vpop.permute.xlu0 %2292
        %2296 = vrot.lane.b32.xlu0 %v2273, 48
        %v2297 = vpop.permute.xlu0 %2296
        %2300 = vrot.lane.b32.xlu0 %v2274, 56
        %v2301 = vpop.permute.xlu0 %2300
        %v2303 = vsel %vm319, %v2267, %v2277
        %v2304 = vsel %vm639, %v2303, %v2281
        %v2305 = vsel %vm641, %v2304, %v2285
        %v2306 = vsel %vm241, %v2305, %v2289
        %v2307 = vsel %vm644, %v2306, %v2293
        %v2308 = vsel %vm646, %v2307, %v2297
        %v2309 = vsel %vm648, %v2308, %v2301
        %v2310 = vsel %vm650, %v2066, 0.0
        %v2311 = vrot.slane %v2310, 4
        %v2312 = vadd.f32 %v2310, %v2311
        %v2313 = vrot.slane %v2312, 2
        %v2314 = vadd.f32 %v2312, %v2313
        %v2315 = vrot.slane %v2314, 1
        %v2316 = vadd.f32 %v2314, %v2315
        %2317 = vrot.lane.b32.xlu0 %v312, 104
        %v2318 = vpop.permute.xlu0 %2317
        %2320 = vxpose.xlu0.b32.start [1/16] %v2318, 128
        %2321 = vxpose.xlu0.b32.cont [2/16] 0.0, 128
        %2322 = vxpose.xlu0.b32.cont [3/16] 0.0, 128
        %2323 = vxpose.xlu0.b32.cont [4/16] 0.0, 128
        %2324 = vxpose.xlu0.b32.cont [5/16] 0.0, 128
        %2325 = vxpose.xlu0.b32.cont [6/16] 0.0, 128
        %2326 = vxpose.xlu0.b32.cont [7/16] 0.0, 128
        %2327 = vxpose.xlu0.b32.cont [8/16] 0.0, 128
        %2328 = vxpose.xlu0.b32.cont [9/16] 0.0, 128
        %2329 = vxpose.xlu0.b32.cont [10/16] 0.0, 128
        %2330 = vxpose.xlu0.b32.cont [11/16] 0.0, 128
        %2331 = vxpose.xlu0.b32.cont [12/16] 0.0, 128
        %2332 = vxpose.xlu0.b32.cont [13/16] 0.0, 128
        %2333 = vxpose.xlu0.b32.cont [14/16] 0.0, 128
        %2334 = vxpose.xlu0.b32.cont [15/16] 0.0, 128
        %2335 = vxpose.xlu0.b32.end [16/16] 0.0, 128
        %v2336 = vpop.trf.xlu0
        %v2337 = vpop.trf.xlu0
        %v2338 = vpop.trf.xlu0
        %v2339 = vpop.trf.xlu0
        %v2340 = vpop.trf.xlu0
        %v2341 = vpop.trf.xlu0
        %v2342 = vpop.trf.xlu0
        %v2343 = vpop.trf.xlu0
        %v2344 = vpop.trf.xlu0
        %v2345 = vpop.trf.xlu0
        %v2346 = vpop.trf.xlu0
        %v2347 = vpop.trf.xlu0
        %v2348 = vpop.trf.xlu0
        %v2349 = vpop.trf.xlu0
        %v2350 = vpop.trf.xlu0
        %v2351 = vpop.trf.xlu0
        %v2353 = vsel %vm319, %v2336, 0
        %2355 = vmatprep.subr.mxu0 0.0
        %2356 = vmatpush1.msra.mxu0 %v2066
        %2357 = vmatprep.subr.mxu0 0.0
        %2358 = vmatpush1.msra.mxu0 0.0
        %2359 = vmatprep.subr.mxu0 0.0
        %2360 = vmatpush1.msra.mxu0 0.0
        %2361 = vmatprep.subr.mxu0 0.0
        %2362 = vmatpush1.msra.mxu0 0.0
        %2363 = vmatprep.subr.mxu0 0.0
        %2364 = vmatpush1.msra.mxu0 0.0
        %2365 = vmatprep.subr.mxu0 0.0
        %2366 = vmatpush1.msra.mxu0 0.0
        %2367 = vmatprep.subr.mxu0 0.0
        %2368 = vmatpush1.msra.mxu0 0.0
        %2369 = vmatprep.subr.mxu0 0.0
        %2370 = vmatpush1.msra.mxu0 0.0
        %2371 = vmatprep.subr.mxu0 0.0
        %2372 = vmatpush1.msra.mxu0 0.0
        %2373 = vmatprep.subr.mxu0 0.0
        %2374 = vmatpush1.msra.mxu0 0.0
        %2375 = vmatprep.subr.mxu0 0.0
        %2376 = vmatpush1.msra.mxu0 0.0
        %2377 = vmatprep.subr.mxu0 0.0
        %2378 = vmatpush1.msra.mxu0 0.0
        %2379 = vmatprep.subr.mxu0 0.0
        %2380 = vmatpush1.msra.mxu0 0.0
        %2381 = vmatprep.subr.mxu0 0.0
        %2382 = vmatpush1.msra.mxu0 0.0
        %2383 = vmatprep.subr.mxu0 0.0
        %2384 = vmatpush1.msra.mxu0 0.0
        %2385 = vmatprep.subr.mxu0 0.0
        %2386 = vmatpush1.msra.mxu0 0.0
        %2387 = vmatprep.subr.mxu0 0.0
        %2388 = vmatpush1.msra.mxu0 0.0
        %2389 = vmatprep.subr.mxu0 0.0
        %2390 = vmatpush1.msra.mxu0 0.0
        %2391 = vmatprep.subr.mxu0 0.0
        %2392 = vmatpush1.msra.mxu0 0.0
        %2393 = vmatprep.subr.mxu0 0.0
        %2394 = vmatpush1.msra.mxu0 0.0
        %2395 = vmatprep.subr.mxu0 0.0
        %2396 = vmatpush1.msra.mxu0 0.0
        %2397 = vmatprep.subr.mxu0 0.0
        %2398 = vmatpush1.msra.mxu0 0.0
        %2399 = vmatprep.subr.mxu0 0.0
        %2400 = vmatpush1.msra.mxu0 0.0
        %2401 = vmatprep.subr.mxu0 0.0
        %2402 = vmatpush1.msra.mxu0 0.0
        %2403 = vmatprep.subr.mxu0 0.0
        %2404 = vmatpush1.msra.mxu0 0.0
        %2405 = vmatprep.subr.mxu0 0.0
        %2406 = vmatpush1.msra.mxu0 0.0
        %2407 = vmatprep.subr.mxu0 0.0
        %2408 = vmatpush1.msra.mxu0 0.0
        %2409 = vmatprep.subr.mxu0 0.0
        %2410 = vmatpush1.msra.mxu0 0.0
        %2411 = vmatprep.subr.mxu0 0.0
        %2412 = vmatpush1.msra.mxu0 0.0
        %2413 = vmatprep.subr.mxu0 0.0
        %2414 = vmatpush1.msra.mxu0 0.0
        %2415 = vmatprep.subr.mxu0 0.0
        %2416 = vmatpush1.msra.mxu0 0.0
        %2417 = vmatprep.subr.mxu0 0.0
        %2418 = vmatpush1.msra.mxu0 0.0
        %2419 = vmatprep.mubr.f32.mxu0 0.0
        %2420 = vmatmul.mubr.f32.gmra.mrb[0].mxu0 %v2353
        %v2421 = vpop.f32.mrb[0].mxu0
        %v2422 = vadd.f32 0.0, %v2421
        %v2423 = vpop.f32.mrb[0].mxu0
        %2424 = vdwg.mxu0
        %2425 = vxpose.xlu0.b32.start [1/16] %v2309, 128
        %2426 = vxpose.xlu0.b32.cont [2/16] 0.0, 128
        %2427 = vxpose.xlu0.b32.cont [3/16] 0.0, 128
        %2428 = vxpose.xlu0.b32.cont [4/16] 0.0, 128
        %2429 = vxpose.xlu0.b32.cont [5/16] 0.0, 128
        %2430 = vxpose.xlu0.b32.cont [6/16] 0.0, 128
        %2431 = vxpose.xlu0.b32.cont [7/16] 0.0, 128
        %2432 = vxpose.xlu0.b32.cont [8/16] 0.0, 128
        %2433 = vxpose.xlu0.b32.cont [9/16] 0.0, 128
        %2434 = vxpose.xlu0.b32.cont [10/16] 0.0, 128
        %2435 = vxpose.xlu0.b32.cont [11/16] 0.0, 128
        %2436 = vxpose.xlu0.b32.cont [12/16] 0.0, 128
        %2437 = vxpose.xlu0.b32.cont [13/16] 0.0, 128
        %2438 = vxpose.xlu0.b32.cont [14/16] 0.0, 128
        %2439 = vxpose.xlu0.b32.cont [15/16] 0.0, 128
        %2440 = vxpose.xlu0.b32.end [16/16] 0.0, 128
        %v2441 = vpop.trf.xlu0
        %v2442 = vpop.trf.xlu0
        %v2443 = vpop.trf.xlu0
        %v2444 = vpop.trf.xlu0
        %v2445 = vpop.trf.xlu0
        %v2446 = vpop.trf.xlu0
        %v2447 = vpop.trf.xlu0
        %v2448 = vpop.trf.xlu0
        %v2449 = vpop.trf.xlu0
        %v2450 = vpop.trf.xlu0
        %v2451 = vpop.trf.xlu0
        %v2452 = vpop.trf.xlu0
        %v2453 = vpop.trf.xlu0
        %v2454 = vpop.trf.xlu0
        %v2455 = vpop.trf.xlu0
        %v2456 = vpop.trf.xlu0
        %v2458 = vsel %vm319, %v2441, 0
        %v2461 = vsel %vm319, %v2442, 0
        %v2464 = vsel %vm319, %v2443, 0
        %v2467 = vsel %vm319, %v2444, 0
        %v2470 = vsel %vm319, %v2445, 0
        %v2473 = vsel %vm319, %v2446, 0
        %v2476 = vsel %vm319, %v2447, 0
        %v2479 = vsel %vm319, %v2448, 0
        %2481 = vmatprep.subr.mxu0 0.0
        %2482 = vmatpush1.msra.mxu0 %v2066
        %2483 = vmatprep.subr.mxu0 0.0
        %2484 = vmatpush1.msra.mxu0 0.0
        %2485 = vmatprep.subr.mxu0 0.0
        %2486 = vmatpush1.msra.mxu0 0.0
        %2487 = vmatprep.subr.mxu0 0.0
        %2488 = vmatpush1.msra.mxu0 0.0
        %2489 = vmatprep.subr.mxu0 0.0
        %2490 = vmatpush1.msra.mxu0 0.0
        %2491 = vmatprep.subr.mxu0 0.0
        %2492 = vmatpush1.msra.mxu0 0.0
        %2493 = vmatprep.subr.mxu0 0.0
        %2494 = vmatpush1.msra.mxu0 0.0
        %2495 = vmatprep.subr.mxu0 0.0
        %2496 = vmatpush1.msra.mxu0 0.0
        %2497 = vmatprep.subr.mxu0 0.0
        %2498 = vmatpush1.msra.mxu0 0.0
        %2499 = vmatprep.subr.mxu0 0.0
        %2500 = vmatpush1.msra.mxu0 0.0
        %2501 = vmatprep.subr.mxu0 0.0
        %2502 = vmatpush1.msra.mxu0 0.0
        %2503 = vmatprep.subr.mxu0 0.0
        %2504 = vmatpush1.msra.mxu0 0.0
        %2505 = vmatprep.subr.mxu0 0.0
        %2506 = vmatpush1.msra.mxu0 0.0
        %2507 = vmatprep.subr.mxu0 0.0
        %2508 = vmatpush1.msra.mxu0 0.0
        %2509 = vmatprep.subr.mxu0 0.0
        %2510 = vmatpush1.msra.mxu0 0.0
        %2511 = vmatprep.subr.mxu0 0.0
        %2512 = vmatpush1.msra.mxu0 0.0
        %2513 = vmatprep.subr.mxu0 0.0
        %2514 = vmatpush1.msra.mxu0 0.0
        %2515 = vmatprep.subr.mxu0 0.0
        %2516 = vmatpush1.msra.mxu0 0.0
        %2517 = vmatprep.subr.mxu0 0.0
        %2518 = vmatpush1.msra.mxu0 0.0
        %2519 = vmatprep.subr.mxu0 0.0
        %2520 = vmatpush1.msra.mxu0 0.0
        %2521 = vmatprep.subr.mxu0 0.0
        %2522 = vmatpush1.msra.mxu0 0.0
        %2523 = vmatprep.subr.mxu0 0.0
        %2524 = vmatpush1.msra.mxu0 0.0
        %2525 = vmatprep.subr.mxu0 0.0
        %2526 = vmatpush1.msra.mxu0 0.0
        %2527 = vmatprep.subr.mxu0 0.0
        %2528 = vmatpush1.msra.mxu0 0.0
        %2529 = vmatprep.subr.mxu0 0.0
        %2530 = vmatpush1.msra.mxu0 0.0
        %2531 = vmatprep.subr.mxu0 0.0
        %2532 = vmatpush1.msra.mxu0 0.0
        %2533 = vmatprep.subr.mxu0 0.0
        %2534 = vmatpush1.msra.mxu0 0.0
        %2535 = vmatprep.subr.mxu0 0.0
        %2536 = vmatpush1.msra.mxu0 0.0
        %2537 = vmatprep.subr.mxu0 0.0
        %2538 = vmatpush1.msra.mxu0 0.0
        %2539 = vmatprep.subr.mxu0 0.0
        %2540 = vmatpush1.msra.mxu0 0.0
        %2541 = vmatprep.subr.mxu0 0.0
        %2542 = vmatpush1.msra.mxu0 0.0
        %2543 = vmatprep.subr.mxu0 0.0
        %2544 = vmatpush1.msra.mxu0 0.0
        %2545 = vmatprep.mubr.f32.mxu0 0.0
        %2546 = vmatmul.mubr.f32.gmra.mrb[0].mxu0 %v2458
        %v2547 = vpop.f32.mrb[0].mxu0
        %v2548 = vadd.f32 0.0, %v2547
        %v2549 = vpop.f32.mrb[0].mxu0
        %2550 = vmatprep.mubr.f32.mxu0 0.0
        %2551 = vmatmul.mubr.f32.gmra.mrb[0].mxu0 %v2461
        %v2552 = vpop.f32.mrb[0].mxu0
        %v2553 = vadd.f32 0.0, %v2552
        %v2554 = vpop.f32.mrb[0].mxu0
        %2555 = vmatprep.mubr.f32.mxu0 0.0
        %2556 = vmatmul.mubr.f32.gmra.mrb[0].mxu0 %v2464
        %v2557 = vpop.f32.mrb[0].mxu0
        %v2558 = vadd.f32 0.0, %v2557
        %v2559 = vpop.f32.mrb[0].mxu0
        %2560 = vmatprep.mubr.f32.mxu0 0.0
        %2561 = vmatmul.mubr.f32.gmra.mrb[0].mxu0 %v2467
        %v2562 = vpop.f32.mrb[0].mxu0
        %v2563 = vadd.f32 0.0, %v2562
        %v2564 = vpop.f32.mrb[0].mxu0
        %2565 = vmatprep.mubr.f32.mxu0 0.0
        %2566 = vmatmul.mubr.f32.gmra.mrb[0].mxu0 %v2470
        %v2567 = vpop.f32.mrb[0].mxu0
        %v2568 = vadd.f32 0.0, %v2567
        %v2569 = vpop.f32.mrb[0].mxu0
        %2570 = vmatprep.mubr.f32.mxu0 0.0
        %2571 = vmatmul.mubr.f32.gmra.mrb[0].mxu0 %v2473
        %v2572 = vpop.f32.mrb[0].mxu0
        %v2573 = vadd.f32 0.0, %v2572
        %v2574 = vpop.f32.mrb[0].mxu0
        %2575 = vmatprep.mubr.f32.mxu0 0.0
        %2576 = vmatmul.mubr.f32.gmra.mrb[0].mxu0 %v2476
        %v2577 = vpop.f32.mrb[0].mxu0
        %v2578 = vadd.f32 0.0, %v2577
        %v2579 = vpop.f32.mrb[0].mxu0
        %2580 = vmatprep.mubr.f32.mxu0 0.0
        %2581 = vmatmul.mubr.f32.gmra.mrb[0].mxu0 %v2479
        %v2582 = vpop.f32.mrb[0].mxu0
        %v2583 = vadd.f32 0.0, %v2582
        %v2584 = vpop.f32.mrb[0].mxu0
        %2585 = vdwg.mxu0
        %s2586 = scalar_lea.vmem %s190, 240
        %v2587 = vld [vmem:[%s2586] sm:$0x1]
        %v2588 = vadd.f32 %v2587, %v2316
        %2589 = vst.msk [vmem:[%s2586] sm:$0x1] %vm926, %v2588
        %v2590 = vld [vmem:[%s2586 + $0x8] sm:$0xff]
        %v2591 = vadd.f32 %v2590, %v2422
        %2592 = vst.msk [vmem:[%s2586 + $0x8] sm:$0xff] %vm650, %v2591
        %v2593 = vld [vmem:[%s2586 + $0x10] sm:$0xff]
        %v2594 = vld [vmem:[%s2586 + $0x18] sm:$0xff]
        %v2595 = vld [vmem:[%s2586 + $0x20] sm:$0xff]
        %v2596 = vld [vmem:[%s2586 + $0x28] sm:$0xff]
        %v2597 = vld [vmem:[%s2586 + $0x30] sm:$0xff]
        %v2598 = vld [vmem:[%s2586 + $0x38] sm:$0xff]
        %v2599 = vld [vmem:[%s2586 + $0x40] sm:$0xff]
        %v2600 = vld [vmem:[%s2586 + $0x48] sm:$0xff]
        %v2601 = vadd.f32 %v2593, %v2548
        %v2602 = vadd.f32 %v2594, %v2553
        %v2603 = vadd.f32 %v2595, %v2558
        %v2604 = vadd.f32 %v2596, %v2563
        %v2605 = vadd.f32 %v2597, %v2568
        %v2606 = vadd.f32 %v2598, %v2573
        %v2607 = vadd.f32 %v2599, %v2578
        %v2608 = vadd.f32 %v2600, %v2583
        %2609 = vst.msk [vmem:[%s2586 + $0x10] sm:$0xff] %vm650, %v2601
        %2610 = vst.msk [vmem:[%s2586 + $0x18] sm:$0xff] %vm650, %v2602
        %2611 = vst.msk [vmem:[%s2586 + $0x20] sm:$0xff] %vm650, %v2603
        %2612 = vst.msk [vmem:[%s2586 + $0x28] sm:$0xff] %vm650, %v2604
        %2613 = vst.msk [vmem:[%s2586 + $0x30] sm:$0xff] %vm650, %v2605
        %2614 = vst.msk [vmem:[%s2586 + $0x38] sm:$0xff] %vm650, %v2606
        %2615 = vst.msk [vmem:[%s2586 + $0x40] sm:$0xff] %vm650, %v2607
        %2616 = vst.msk [vmem:[%s2586 + $0x48] sm:$0xff] %vm650, %v2608
        %p2617 = scmp.lt.s32.totalorder %s21, 1
        %s2618 = scalar_select %p2617, %s21, 1
        %s2619 = smul.addr %s2618, 40
        %s2620 = smul.addr %s2619, 8
        %s2621 = scalar_lea.vmem %s2, %s2620
        // Predicated region
        $region41: #{tpu_custom_call.1} parent=27 // pred_check
          %p2622 = pneg %p96
        $region42: #{tpu_custom_call.1} parent=27 // pred_check_branch
          %2624 = sbr.rel (%p2622) target = $region44
        $region43: #{tpu_custom_call.1} parent=27 // pred_region
          _
        $region44: #{tpu_custom_call.1} parent=27 // pred_fallthru
          _
      $region28: #{tpu_custom_call.1} parent=5 // pred_fallthru
        _
      %p2625 = scmp.le.s32.totalorder 2, %s12
      // Predicated region
      $region45: #{tpu_custom_call.1} parent=5 // pred_check
        %p2626 = pneg %p2625
      $region46: #{tpu_custom_call.1} parent=5 // pred_check_branch
        %2628 = sbr.rel (%p2626) target = $region48
      $region47: #{tpu_custom_call.1} parent=5 // pred_region
        %s2629 = ssub.s32 %s12, 2
        // Predicated region
        $region49: #{tpu_custom_call.1} parent=47 // pred_check
          %p2630 = pneg %p102
        $region50: #{tpu_custom_call.1} parent=47 // pred_check_branch
          %2632 = sbr.rel (%p2630) target = $region52
        $region51: #{tpu_custom_call.1} parent=47 // pred_region
          %p2633 = scmp.lt.s32.totalorder %s23, 1
          %s2634 = scalar_select %p2633, %s23, 1
          %s2635 = smul.addr %s2634, 40
          %s2636 = smul.addr %s2635, 8
          %s2637 = scalar_lea.vmem %s2, %s2636
        $region52: #{tpu_custom_call.1} parent=47 // pred_fallthru
          _
      $region48: #{tpu_custom_call.1} parent=5 // pred_fallthru
        _
    $region6: #{tpu_custom_call.1} parent=1 // loop_footer
      %s16 = sadd.s32 1, %s12
    $region7: #{tpu_custom_call.1} parent=1 // loop_footer_branch
      %11 = sbr.rel target = $region3
    $region8: #{tpu_custom_call.1} parent=1 // loop_exit
      _
    %2638 = vsyncpa [#allocation3], 1
    %s2639 = scalar_lea.sflag [#allocation3], 1
    %2640 = vsyncpa %s2639, 1
    %2641 = vsyncpa [#allocation5], 1

</llo_original>
